<compile_context>
chip_gen: v5e
topology: v5e:2x2
jax: 0.10.0
libtpu: 0.0.40
codegen_flags: <defaults>
</compile_context>

<pallas_src>
import functools

import jax
import jax.numpy as jnp
import numpy as np
from jax.experimental import pallas as pl
from jax.experimental.pallas import tpu as pltpu

NUM_FIELDS = 9
LANE = 128


# ----------------------------- config (small) -------------------------------
class Cfg:
    vocab_size = 64
    hidden_size = 32
    embedding_size = 32            # defaults to hidden_size
    pad_token_id = 0
    max_position_embeddings = 16
    type_vocab_size = 2
    age_size = 8
    visit_size = 12
    gender_size = 4
    year_size = 8
    eth_size = 8
    imd_size = 8
    layer_norm_eps = 1e-12
    hidden_dropout_prob = 0.1      # identity at inference
    position_include = True
    segment_include = True
    position_embedding_type = "absolute"


def _round_up(x, m):
    return (x + m - 1) // m * m


def _cdiv(a, b):
    return -(-a // b)


# ------------------------------- kernel -------------------------------------
def _ehr_embeddings_kernel(slab_widths, h_real, eps, ids_ref, table_ref,
                           gamma_ref, beta_ref, out_ref):
    """One row-tile: per-field-slab multi-hot gather-sum + LayerNorm.

    ids_ref   : (TILE_N, 9) int32 raw per-field ids (no offsets)
    table_ref : (V_pad, H_pad) param_dtype; 9 tables, each in its own
                128-lane-aligned slab, zero-padded rows/columns
    gamma_ref : (1, H_pad) f32 (zero on pad lanes)
    beta_ref  : (1, H_pad) f32 (zero on pad lanes)
    out_ref   : (TILE_N, H_pad) out_dtype
    """
    ids = ids_ref[...]                                    # (TILE_N, 9)
    tile_n = out_ref.shape[0]
    h_pad = out_ref.shape[1]
    dt = table_ref.dtype

    # One iota per distinct slab width, hoisted (JAX does not CSE
    # broadcast_in_dim, so build each width exactly once).
    iotas = {w: jax.lax.broadcasted_iota(jnp.int32, (tile_n, w), 1)
             for w in sorted(set(slab_widths))}

    # Per-field one-hot restricted to that field's slab only, then a
    # lane-aligned concatenation -> (TILE_N, V_pad) multi-hot.  Compare work is
    # per-slab width instead of the full fused vocabulary.
    pieces = [(iotas[w] == ids[:, f:f + 1]).astype(dt)
              for f, w in enumerate(slab_widths)]
    multi = jnp.concatenate(pieces, axis=-1)               # (TILE_N, V_pad)

    # Single fused MXU matmul = gather + sum over all 9 fields, f32 accumulate.
    acc = jnp.dot(multi, table_ref[...],
                  preferred_element_type=jnp.float32)      # (TILE_N, H_pad)

    # LayerNorm over the real hidden lanes.  Pad lanes of `acc` are exactly
    # zero (zero table columns), so after centering each contributes mean^2 to
    # the sum of squares; subtract that exactly (two-pass, numerically robust).
    inv_h = 1.0 / float(h_real)
    pad_lanes = float(h_pad - h_real)
    mean = jnp.sum(acc, axis=-1, keepdims=True) * inv_h
    cent = acc - mean
    var = (jnp.sum(cent * cent, axis=-1, keepdims=True)
           - pad_lanes * mean * mean) * inv_h              # biased, like nn.LayerNorm
    inv_std = jax.lax.rsqrt(var + eps)                     # EUP slot
    y = cent * inv_std * gamma_ref[...] + beta_ref[...]
    out_ref[...] = y.astype(out_ref.dtype)
    # Dropout: identity in eval mode (no RNG applied).
    # TODO(synk): training-mode dropout RNG not implemented in-kernel.


# ------------------------------ wrapper --------------------------------------
def ehr_bert_embeddings(ids_packed, tables, gamma, beta, eps, *,
                        param_dtype=jnp.bfloat16, out_dtype=jnp.float32,
                        tile_n=1024):
    """ids_packed: (N, 9) int32 raw per-field ids; tables: 9 x (V_f, H) f32.

    Returns (N, H) out_dtype.
    """
    n, nf = ids_packed.shape
    assert nf == NUM_FIELDS
    h = int(tables[0].shape[1])

    # ---- fuse the 9 tables into one table of 128-aligned per-field slabs ----
    sizes = [int(t.shape[0]) for t in tables]
    slab_widths = tuple(_round_up(max(s, LANE), LANE) for s in sizes)
    slab_offsets = np.concatenate([[0], np.cumsum(slab_widths)[:-1]]).astype(int)
    v_pad = int(np.sum(slab_widths))
    h_pad = _round_up(max(h, LANE), LANE)            # lane-dense output

    fused = jnp.zeros((v_pad, h_pad), jnp.float32)
    for f, t in enumerate(tables):
        off = int(slab_offsets[f])
        fused = fused.at[off:off + sizes[f], :h].set(t.astype(jnp.float32))
    fused = fused.astype(param_dtype)
    # TODO(synk): at production word-vocab sizes keep the word sub-table in HBM
    # (memory_space=pl.ANY) with a vocab-chunk grid axis ("arbitrary") and a
    # VMEM f32 accumulator (or a DMA row-gather on v5e); the 8 small fields can
    # stay on this fused one-hot-matmul path.

    gamma_p = jnp.zeros((1, h_pad), jnp.float32).at[:, :h].set(
        gamma.reshape(1, h).astype(jnp.float32))
    beta_p = jnp.zeros((1, h_pad), jnp.float32).at[:, :h].set(
        beta.reshape(1, h).astype(jnp.float32))

    # ---- adaptive row tile (big tiles amortize per-step pipeline overhead) ----
    param_bytes = jnp.dtype(param_dtype).itemsize
    # per-row VMEM cost of the (tile_n, V_pad) multi-hot + f32 LN intermediates
    bytes_per_row = v_pad * param_bytes + 4 * h_pad * 4
    budget = 12 * 1024 * 1024
    n8 = _round_up(n, 8)
    tile_n = max(8, min(int(tile_n), budget // bytes_per_row, n8))
    tile_n = _round_up(tile_n, 8)
    num_tiles = _cdiv(n8, tile_n)
    # v7x megacore ("parallel" row axis): prefer >= 2, even, grid steps.
    if num_tiles == 1 and n8 >= 16:
        tile_n = _round_up(_cdiv(n8, 2), 8)
        num_tiles = _cdiv(n8, tile_n)
    elif num_tiles > 2 and num_tiles % 2 == 1:
        num_tiles += 1
    n_pad = num_tiles * tile_n

    ids = ids_packed.astype(jnp.int32)
    if n_pad != n:
        ids = jnp.pad(ids, ((0, n_pad - n), (0, 0)))

    kernel = functools.partial(_ehr_embeddings_kernel, slab_widths, h,
                               float(eps))

    def _resident_spec(shape, single_buffer):
        # Constant index_map -> block is VMEM-resident and never refetched;
        # single-buffer it to halve its VMEM footprint where supported.
        idx = lambda i: (0, 0)
        if single_buffer:
            try:
                return pl.BlockSpec(shape, idx, pipeline_mode=pl.Buffered(1))
            except (TypeError, AttributeError):
                pass
        return pl.BlockSpec(shape, idx)

    def _call(single_buffer):
        return pl.pallas_call(
            kernel,
            out_shape=jax.ShapeDtypeStruct((n_pad, h_pad), out_dtype),
            grid=(num_tiles,),
            in_specs=[
                pl.BlockSpec((tile_n, NUM_FIELDS), lambda i: (i, 0)),   # ids
                _resident_spec((v_pad, h_pad), single_buffer),          # table
                _resident_spec((1, h_pad), single_buffer),              # gamma
                _resident_spec((1, h_pad), single_buffer),              # beta
            ],
            out_specs=pl.BlockSpec((tile_n, h_pad), lambda i: (i, 0)),
            compiler_params=pltpu.CompilerParams(
                dimension_semantics=("parallel",),
                vmem_limit_bytes=32 * 1024 * 1024),
        )(ids, fused, gamma_p, beta_p)

    try:
        out = _call(single_buffer=True)
    except Exception:
        # This JAX build rejects pipeline_mode=pl.Buffered(1); fall back to the
        # default double-buffered resident blocks (identical numerics).
        out = _call(single_buffer=False)

    # NOTE: at production H (a multiple of 128) there is no lane padding and the
    # row un-pad should be fused into the consumer (or the padded slab consumed
    # directly) instead of this extra slice pass; kept here for the toy test.
    return out[:n, :h]


# ------------------------------ reference ------------------------------------
def _reference(ids_packed, tables, gamma, beta, eps, param_dtype=jnp.bfloat16):
    # Reference uses the same (bf16-rounded) parameters the kernel consumes so
    # tolerances can stay tight; set param_dtype=jnp.float32 for pure f32.
    q = [t.astype(param_dtype).astype(jnp.float32) for t in tables]
    acc = jnp.zeros((ids_packed.shape[0], q[0].shape[1]), jnp.float32)
    for f, tbl in enumerate(q):
        acc = acc + tbl[ids_packed[:, f]]
    mean = jnp.mean(acc, axis=-1, keepdims=True)
    var = jnp.mean((acc - mean) ** 2, axis=-1, keepdims=True)
    return (acc - mean) * jax.lax.rsqrt(var + eps) * gamma + beta


# -------------------------------- main ----------------------------------------
if __name__ == "__main__":
    cfg = Cfg()
    B, S, H = 2, 8, cfg.hidden_size
    N = B * S

    key = jax.random.PRNGKey(0)
    ks = jax.random.split(key, 16)

    # Deterministic parameter init (N(0, 0.02) like BERT); padding_idx row zeroed.
    def init_table(k, v):
        return (0.02 * jax.random.normal(k, (v, H))).astype(jnp.float32)

    w_word = init_table(ks[0], cfg.vocab_size)
    w_word = w_word.at[cfg.pad_token_id].set(0.0)          # nn.Embedding padding_idx
    w_pos = init_table(ks[1], cfg.max_position_embeddings)
    w_type = init_table(ks[2], cfg.type_vocab_size)
    w_age = init_table(ks[3], cfg.age_size)
    w_visit = init_table(ks[4], cfg.visit_size)
    w_gender = init_table(ks[5], cfg.gender_size)
    w_year = init_table(ks[6], cfg.year_size)
    w_eth = init_table(ks[7], cfg.eth_size)
    w_imd = init_table(ks[8], cfg.imd_size)
    tables = [w_word, w_pos, w_type, w_age, w_visit, w_gender, w_year, w_eth, w_imd]

    gamma = jnp.ones((1, H), jnp.float32)
    beta = jnp.zeros((1, H), jnp.float32)

    # Deterministic example inputs.
    input_ids = jax.random.randint(ks[9], (B, S), 0, cfg.vocab_size, jnp.int32)
    position_ids = jnp.broadcast_to(jnp.arange(S, dtype=jnp.int32), (B, S))
    token_type_ids = jnp.zeros((B, S), jnp.int32)
    age_ids = jax.random.randint(ks[10], (B, S), 0, cfg.age_size, jnp.int32)
    visit_ids = jax.random.randint(ks[11], (B, S), 0, cfg.visit_size, jnp.int32)
    gender_ids = jax.random.randint(ks[12], (B, S), 0, cfg.gender_size, jnp.int32)
    year_ids = jax.random.randint(ks[13], (B, S), 0, cfg.year_size, jnp.int32)
    eth_ids = jax.random.randint(ks[14], (B, S), 0, cfg.eth_size, jnp.int32)
    imd_ids = jax.random.randint(ks[15], (B, S), 0, cfg.imd_size, jnp.int32)

    ids_packed = jnp.stack(
        [input_ids, position_ids, token_type_ids, age_ids, visit_ids,
         gender_ids, year_ids, eth_ids, imd_ids], axis=-1
    ).reshape(N, NUM_FIELDS).astype(jnp.int32)

    out_flat = ehr_bert_embeddings(ids_packed, tables, gamma, beta,
                                   cfg.layer_norm_eps)
    out = out_flat.reshape(B, S, H)
    jax.block_until_ready(out)

    ref = _reference(ids_packed, tables, gamma, beta,
                     cfg.layer_norm_eps).reshape(B, S, H)
    np.testing.assert_allclose(np.asarray(out), np.asarray(ref),
                               atol=1e-5, rtol=1e-5)
    print("KERNEL_OK")
</pallas_src>

<mosaic_0001>
module attributes {stable_mosaic.version = 11 : i64} {
  func.func @_ehr_embeddings_kernel(%arg0: i32, %arg1: memref<8x9xi32, #tpu.memory_space<vmem>>, %arg2: memref<1152x128xbf16, #tpu.memory_space<vmem>>, %arg3: memref<1x128xf32, #tpu.memory_space<vmem>>, %arg4: memref<1x128xf32, #tpu.memory_space<vmem>>, %arg5: memref<8x128xf32, #tpu.memory_space<vmem>>) attributes {dimension_semantics = [#tpu.dimension_semantics<parallel>], iteration_bounds = array<i64: 2>, scalar_prefetch = 0 : i64, scratch_operands = 0 : i64, tpu.core_type = #tpu.core_type<tc>, window_params = [{transform_indices = @transform_0, window_bounds = array<i64: 8, 9>}, {pipeline_mode = #tpu.pipeline_mode<synchronous>, transform_indices = @transform_1, window_bounds = array<i64: 1152, 128>}, {pipeline_mode = #tpu.pipeline_mode<synchronous>, transform_indices = @transform_2, window_bounds = array<i64: 1, 128>}, {pipeline_mode = #tpu.pipeline_mode<synchronous>, transform_indices = @transform_3, window_bounds = array<i64: 1, 128>}, {transform_indices = @transform_4, window_bounds = array<i64: 8, 128>}]} {
    %c0 = arith.constant 0 : index
    %c0_0 = arith.constant 0 : index
    %0 = vector.load %arg1[%c0, %c0_0] : memref<8x9xi32, #tpu.memory_space<vmem>>, vector<8x9xi32>
    %1 = tpu.iota {dimensions = array<i32: 1>} : vector<8x128xi32>
    %2 = vector.extract_strided_slice %0 {offsets = [0, 0], sizes = [8, 1], strides = [1, 1]} : vector<8x9xi32> to vector<8x1xi32>
    %3 = vector.broadcast %2 : vector<8x1xi32> to vector<8x128xi32>
    %4 = arith.cmpi eq, %1, %3 : vector<8x128xi32>
    %5 = arith.extui %4 : vector<8x128xi1> to vector<8x128xi32>
    %6 = arith.sitofp %5 : vector<8x128xi32> to vector<8x128xf32>
    %7 = arith.truncf %6 : vector<8x128xf32> to vector<8x128xbf16>
    %8 = vector.extract_strided_slice %0 {offsets = [0, 1], sizes = [8, 1], strides = [1, 1]} : vector<8x9xi32> to vector<8x1xi32>
    %9 = vector.broadcast %8 : vector<8x1xi32> to vector<8x128xi32>
    %10 = arith.cmpi eq, %1, %9 : vector<8x128xi32>
    %11 = arith.extui %10 : vector<8x128xi1> to vector<8x128xi32>
    %12 = arith.sitofp %11 : vector<8x128xi32> to vector<8x128xf32>
    %13 = arith.truncf %12 : vector<8x128xf32> to vector<8x128xbf16>
    %14 = vector.extract_strided_slice %0 {offsets = [0, 2], sizes = [8, 1], strides = [1, 1]} : vector<8x9xi32> to vector<8x1xi32>
    %15 = vector.broadcast %14 : vector<8x1xi32> to vector<8x128xi32>
    %16 = arith.cmpi eq, %1, %15 : vector<8x128xi32>
    %17 = arith.extui %16 : vector<8x128xi1> to vector<8x128xi32>
    %18 = arith.sitofp %17 : vector<8x128xi32> to vector<8x128xf32>
    %19 = arith.truncf %18 : vector<8x128xf32> to vector<8x128xbf16>
    %20 = vector.extract_strided_slice %0 {offsets = [0, 3], sizes = [8, 1], strides = [1, 1]} : vector<8x9xi32> to vector<8x1xi32>
    %21 = vector.broadcast %20 : vector<8x1xi32> to vector<8x128xi32>
    %22 = arith.cmpi eq, %1, %21 : vector<8x128xi32>
    %23 = arith.extui %22 : vector<8x128xi1> to vector<8x128xi32>
    %24 = arith.sitofp %23 : vector<8x128xi32> to vector<8x128xf32>
    %25 = arith.truncf %24 : vector<8x128xf32> to vector<8x128xbf16>
    %26 = vector.extract_strided_slice %0 {offsets = [0, 4], sizes = [8, 1], strides = [1, 1]} : vector<8x9xi32> to vector<8x1xi32>
    %27 = vector.broadcast %26 : vector<8x1xi32> to vector<8x128xi32>
    %28 = arith.cmpi eq, %1, %27 : vector<8x128xi32>
    %29 = arith.extui %28 : vector<8x128xi1> to vector<8x128xi32>
    %30 = arith.sitofp %29 : vector<8x128xi32> to vector<8x128xf32>
    %31 = arith.truncf %30 : vector<8x128xf32> to vector<8x128xbf16>
    %32 = vector.extract_strided_slice %0 {offsets = [0, 5], sizes = [8, 1], strides = [1, 1]} : vector<8x9xi32> to vector<8x1xi32>
    %33 = vector.broadcast %32 : vector<8x1xi32> to vector<8x128xi32>
    %34 = arith.cmpi eq, %1, %33 : vector<8x128xi32>
    %35 = arith.extui %34 : vector<8x128xi1> to vector<8x128xi32>
    %36 = arith.sitofp %35 : vector<8x128xi32> to vector<8x128xf32>
    %37 = arith.truncf %36 : vector<8x128xf32> to vector<8x128xbf16>
    %38 = vector.extract_strided_slice %0 {offsets = [0, 6], sizes = [8, 1], strides = [1, 1]} : vector<8x9xi32> to vector<8x1xi32>
    %39 = vector.broadcast %38 : vector<8x1xi32> to vector<8x128xi32>
    %40 = arith.cmpi eq, %1, %39 : vector<8x128xi32>
    %41 = arith.extui %40 : vector<8x128xi1> to vector<8x128xi32>
    %42 = arith.sitofp %41 : vector<8x128xi32> to vector<8x128xf32>
    %43 = arith.truncf %42 : vector<8x128xf32> to vector<8x128xbf16>
    %44 = vector.extract_strided_slice %0 {offsets = [0, 7], sizes = [8, 1], strides = [1, 1]} : vector<8x9xi32> to vector<8x1xi32>
    %45 = vector.broadcast %44 : vector<8x1xi32> to vector<8x128xi32>
    %46 = arith.cmpi eq, %1, %45 : vector<8x128xi32>
    %47 = arith.extui %46 : vector<8x128xi1> to vector<8x128xi32>
    %48 = arith.sitofp %47 : vector<8x128xi32> to vector<8x128xf32>
    %49 = arith.truncf %48 : vector<8x128xf32> to vector<8x128xbf16>
    %50 = vector.extract_strided_slice %0 {offsets = [0, 8], sizes = [8, 1], strides = [1, 1]} : vector<8x9xi32> to vector<8x1xi32>
    %51 = vector.broadcast %50 : vector<8x1xi32> to vector<8x128xi32>
    %52 = arith.cmpi eq, %1, %51 : vector<8x128xi32>
    %53 = arith.extui %52 : vector<8x128xi1> to vector<8x128xi32>
    %54 = arith.sitofp %53 : vector<8x128xi32> to vector<8x128xf32>
    %55 = arith.truncf %54 : vector<8x128xf32> to vector<8x128xbf16>
    %56 = tpu.concatenate %7, %13, %19, %25, %31, %37, %43, %49, %55 in 1 : vector<8x128xbf16>, vector<8x128xbf16>, vector<8x128xbf16>, vector<8x128xbf16>, vector<8x128xbf16>, vector<8x128xbf16>, vector<8x128xbf16>, vector<8x128xbf16>, vector<8x128xbf16> -> vector<8x1152xbf16>
    %c0_1 = arith.constant 0 : index
    %c0_2 = arith.constant 0 : index
    %57 = vector.load %arg2[%c0_1, %c0_2] : memref<1152x128xbf16, #tpu.memory_space<vmem>>, vector<1152x128xbf16>
    %cst = arith.constant dense<0.000000e+00> : vector<8x128xf32>
    %58 = tpu.matmul %56, %57, %cst {dimension_numbers = #tpu.dot_dimension_numbers<[1], [0], [0], [1], [0, 0, 1, 1], [], []>} : vector<8x1152xbf16>, vector<1152x128xbf16>, vector<8x128xf32> -> vector<8x128xf32>
    %cst_3 = arith.constant dense<0.000000e+00> : vector<8xf32>
    %59 = vector.multi_reduction <add>, %58, %cst_3 [1] : vector<8x128xf32> to vector<8xf32>
    %60 = vector.shape_cast %59 : vector<8xf32> to vector<8x1xf32>
    %cst_4 = arith.constant 3.125000e-02 : f32
    %61 = vector.broadcast %cst_4 : f32 to vector<8x1xf32>
    %62 = arith.mulf %60, %61 : vector<8x1xf32>
    %63 = vector.broadcast %62 : vector<8x1xf32> to vector<8x128xf32>
    %64 = arith.subf %58, %63 : vector<8x128xf32>
    %65 = arith.mulf %64, %64 : vector<8x128xf32>
    %cst_5 = arith.constant dense<0.000000e+00> : vector<8xf32>
    %66 = vector.multi_reduction <add>, %65, %cst_5 [1] : vector<8x128xf32> to vector<8xf32>
    %67 = vector.shape_cast %66 : vector<8xf32> to vector<8x1xf32>
    %cst_6 = arith.constant 9.600000e+01 : f32
    %68 = vector.broadcast %cst_6 : f32 to vector<8x1xf32>
    %69 = arith.mulf %68, %62 : vector<8x1xf32>
    %70 = arith.mulf %69, %62 : vector<8x1xf32>
    %71 = arith.subf %67, %70 : vector<8x1xf32>
    %cst_7 = arith.constant 3.125000e-02 : f32
    %72 = vector.broadcast %cst_7 : f32 to vector<8x1xf32>
    %73 = arith.mulf %71, %72 : vector<8x1xf32>
    %cst_8 = arith.constant 9.99999996E-13 : f32
    %74 = vector.broadcast %cst_8 : f32 to vector<8x1xf32>
    %75 = arith.addf %73, %74 : vector<8x1xf32>
    %76 = math.rsqrt %75 : vector<8x1xf32>
    %77 = vector.broadcast %76 : vector<8x1xf32> to vector<8x128xf32>
    %78 = arith.mulf %64, %77 : vector<8x128xf32>
    %c0_9 = arith.constant 0 : index
    %c0_10 = arith.constant 0 : index
    %79 = vector.load %arg3[%c0_9, %c0_10] : memref<1x128xf32, #tpu.memory_space<vmem>>, vector<1x128xf32>
    %80 = vector.broadcast %79 : vector<1x128xf32> to vector<8x128xf32>
    %81 = arith.mulf %78, %80 : vector<8x128xf32>
    %c0_11 = arith.constant 0 : index
    %c0_12 = arith.constant 0 : index
    %82 = vector.load %arg4[%c0_11, %c0_12] : memref<1x128xf32, #tpu.memory_space<vmem>>, vector<1x128xf32>
    %83 = vector.broadcast %82 : vector<1x128xf32> to vector<8x128xf32>
    %84 = arith.addf %81, %83 : vector<8x128xf32>
    %c0_13 = arith.constant 0 : index
    %c0_14 = arith.constant 0 : index
    %85 = vector.load %arg5[%c0_13, %c0_14] : memref<8x128xf32, #tpu.memory_space<vmem>>, vector<8x128xf32>
    tpu.vector_store %arg5[%c0_13, %c0_14], %84 {strides = array<i32>} : memref<8x128xf32, #tpu.memory_space<vmem>>, vector<8x128xf32>,
    return
  }
  func.func @transform_0(%arg0: i32) -> (i32, i32) {
    %c0_i32 = arith.constant 0 : i32
    %c0_i32_0 = arith.constant 0 : i32
    return %arg0, %c0_i32 : i32, i32
  }
  func.func @transform_1(%arg0: i32) -> (i32, i32) {
    %c0_i32 = arith.constant 0 : i32
    %c0_i32_0 = arith.constant 0 : i32
    %c0_i32_1 = arith.constant 0 : i32
    return %c0_i32, %c0_i32_0 : i32, i32
  }
  func.func @transform_2(%arg0: i32) -> (i32, i32) {
    %c0_i32 = arith.constant 0 : i32
    %c0_i32_0 = arith.constant 0 : i32
    %c0_i32_1 = arith.constant 0 : i32
    return %c0_i32, %c0_i32_0 : i32, i32
  }
  func.func @transform_3(%arg0: i32) -> (i32, i32) {
    %c0_i32 = arith.constant 0 : i32
    %c0_i32_0 = arith.constant 0 : i32
    %c0_i32_1 = arith.constant 0 : i32
    return %c0_i32, %c0_i32_0 : i32, i32
  }
  func.func @transform_4(%arg0: i32) -> (i32, i32) {
    %c0_i32 = arith.constant 0 : i32
    %c0_i32_0 = arith.constant 0 : i32
    return %arg0, %c0_i32 : i32, i32
  }
}

module attributes {stable_mosaic.version = 11 : i64} {
  func.func @_ehr_embeddings_kernel(%arg0: i32, %arg1: memref<8x9xi32, #tpu.memory_space<vmem>>, %arg2: memref<1152x128xbf16, #tpu.memory_space<vmem>>, %arg3: memref<1x128xf32, #tpu.memory_space<vmem>>, %arg4: memref<1x128xf32, #tpu.memory_space<vmem>>, %arg5: memref<8x128xf32, #tpu.memory_space<vmem>>) attributes {dimension_semantics = [#tpu.dimension_semantics<parallel>], iteration_bounds = array<i64: 2>, scalar_prefetch = 0 : i64, scratch_operands = 0 : i64, tpu.core_type = #tpu.core_type<tc>, window_params = [{transform_indices = @transform_0, window_bounds = array<i64: 8, 9>}, {pipeline_mode = #tpu.pipeline_mode<synchronous>, transform_indices = @transform_1, window_bounds = array<i64: 1152, 128>}, {pipeline_mode = #tpu.pipeline_mode<synchronous>, transform_indices = @transform_2, window_bounds = array<i64: 1, 128>}, {pipeline_mode = #tpu.pipeline_mode<synchronous>, transform_indices = @transform_3, window_bounds = array<i64: 1, 128>}, {transform_indices = @transform_4, window_bounds = array<i64: 8, 128>}]} {
    %c0 = arith.constant 0 : index
    %c0_0 = arith.constant 0 : index
    %0 = vector.load %arg1[%c0, %c0_0] : memref<8x9xi32, #tpu.memory_space<vmem>>, vector<8x9xi32>
    %1 = tpu.iota {dimensions = array<i32: 1>} : vector<8x128xi32>
    %2 = vector.extract_strided_slice %0 {offsets = [0, 0], sizes = [8, 1], strides = [1, 1]} : vector<8x9xi32> to vector<8x1xi32>
    %3 = vector.broadcast %2 : vector<8x1xi32> to vector<8x128xi32>
    %4 = arith.cmpi eq, %1, %3 : vector<8x128xi32>
    %5 = arith.extui %4 : vector<8x128xi1> to vector<8x128xi32>
    %6 = arith.sitofp %5 : vector<8x128xi32> to vector<8x128xf32>
    %7 = arith.truncf %6 : vector<8x128xf32> to vector<8x128xbf16>
    %8 = vector.extract_strided_slice %0 {offsets = [0, 1], sizes = [8, 1], strides = [1, 1]} : vector<8x9xi32> to vector<8x1xi32>
    %9 = vector.broadcast %8 : vector<8x1xi32> to vector<8x128xi32>
    %10 = arith.cmpi eq, %1, %9 : vector<8x128xi32>
    %11 = arith.extui %10 : vector<8x128xi1> to vector<8x128xi32>
    %12 = arith.sitofp %11 : vector<8x128xi32> to vector<8x128xf32>
    %13 = arith.truncf %12 : vector<8x128xf32> to vector<8x128xbf16>
    %14 = vector.extract_strided_slice %0 {offsets = [0, 2], sizes = [8, 1], strides = [1, 1]} : vector<8x9xi32> to vector<8x1xi32>
    %15 = vector.broadcast %14 : vector<8x1xi32> to vector<8x128xi32>
    %16 = arith.cmpi eq, %1, %15 : vector<8x128xi32>
    %17 = arith.extui %16 : vector<8x128xi1> to vector<8x128xi32>
    %18 = arith.sitofp %17 : vector<8x128xi32> to vector<8x128xf32>
    %19 = arith.truncf %18 : vector<8x128xf32> to vector<8x128xbf16>
    %20 = vector.extract_strided_slice %0 {offsets = [0, 3], sizes = [8, 1], strides = [1, 1]} : vector<8x9xi32> to vector<8x1xi32>
    %21 = vector.broadcast %20 : vector<8x1xi32> to vector<8x128xi32>
    %22 = arith.cmpi eq, %1, %21 : vector<8x128xi32>
    %23 = arith.extui %22 : vector<8x128xi1> to vector<8x128xi32>
    %24 = arith.sitofp %23 : vector<8x128xi32> to vector<8x128xf32>
    %25 = arith.truncf %24 : vector<8x128xf32> to vector<8x128xbf16>
    %26 = vector.extract_strided_slice %0 {offsets = [0, 4], sizes = [8, 1], strides = [1, 1]} : vector<8x9xi32> to vector<8x1xi32>
    %27 = vector.broadcast %26 : vector<8x1xi32> to vector<8x128xi32>
    %28 = arith.cmpi eq, %1, %27 : vector<8x128xi32>
    %29 = arith.extui %28 : vector<8x128xi1> to vector<8x128xi32>
    %30 = arith.sitofp %29 : vector<8x128xi32> to vector<8x128xf32>
    %31 = arith.truncf %30 : vector<8x128xf32> to vector<8x128xbf16>
    %32 = vector.extract_strided_slice %0 {offsets = [0, 5], sizes = [8, 1], strides = [1, 1]} : vector<8x9xi32> to vector<8x1xi32>
    %33 = vector.broadcast %32 : vector<8x1xi32> to vector<8x128xi32>
    %34 = arith.cmpi eq, %1, %33 : vector<8x128xi32>
    %35 = arith.extui %34 : vector<8x128xi1> to vector<8x128xi32>
    %36 = arith.sitofp %35 : vector<8x128xi32> to vector<8x128xf32>
    %37 = arith.truncf %36 : vector<8x128xf32> to vector<8x128xbf16>
    %38 = vector.extract_strided_slice %0 {offsets = [0, 6], sizes = [8, 1], strides = [1, 1]} : vector<8x9xi32> to vector<8x1xi32>
    %39 = vector.broadcast %38 : vector<8x1xi32> to vector<8x128xi32>
    %40 = arith.cmpi eq, %1, %39 : vector<8x128xi32>
    %41 = arith.extui %40 : vector<8x128xi1> to vector<8x128xi32>
    %42 = arith.sitofp %41 : vector<8x128xi32> to vector<8x128xf32>
    %43 = arith.truncf %42 : vector<8x128xf32> to vector<8x128xbf16>
    %44 = vector.extract_strided_slice %0 {offsets = [0, 7], sizes = [8, 1], strides = [1, 1]} : vector<8x9xi32> to vector<8x1xi32>
    %45 = vector.broadcast %44 : vector<8x1xi32> to vector<8x128xi32>
    %46 = arith.cmpi eq, %1, %45 : vector<8x128xi32>
    %47 = arith.extui %46 : vector<8x128xi1> to vector<8x128xi32>
    %48 = arith.sitofp %47 : vector<8x128xi32> to vector<8x128xf32>
    %49 = arith.truncf %48 : vector<8x128xf32> to vector<8x128xbf16>
    %50 = vector.extract_strided_slice %0 {offsets = [0, 8], sizes = [8, 1], strides = [1, 1]} : vector<8x9xi32> to vector<8x1xi32>
    %51 = vector.broadcast %50 : vector<8x1xi32> to vector<8x128xi32>
    %52 = arith.cmpi eq, %1, %51 : vector<8x128xi32>
    %53 = arith.extui %52 : vector<8x128xi1> to vector<8x128xi32>
    %54 = arith.sitofp %53 : vector<8x128xi32> to vector<8x128xf32>
    %55 = arith.truncf %54 : vector<8x128xf32> to vector<8x128xbf16>
    %56 = tpu.concatenate %7, %13, %19, %25, %31, %37, %43, %49, %55 in 1 : vector<8x128xbf16>, vector<8x128xbf16>, vector<8x128xbf16>, vector<8x128xbf16>, vector<8x128xbf16>, vector<8x128xbf16>, vector<8x128xbf16>, vector<8x128xbf16>, vector<8x128xbf16> -> vector<8x1152xbf16>
    %c0_1 = arith.constant 0 : index
    %c0_2 = arith.constant 0 : index
    %57 = vector.load %arg2[%c0_1, %c0_2] : memref<1152x128xbf16, #tpu.memory_space<vmem>>, vector<1152x128xbf16>
    %cst = arith.constant dense<0.000000e+00> : vector<8x128xf32>
    %58 = tpu.matmul %56, %57, %cst {dimension_numbers = #tpu.dot_dimension_numbers<[1], [0], [0], [1], [0, 0, 1, 1], [], []>} : vector<8x1152xbf16>, vector<1152x128xbf16>, vector<8x128xf32> -> vector<8x128xf32>
    %cst_3 = arith.constant dense<0.000000e+00> : vector<8xf32>
    %59 = vector.multi_reduction <add>, %58, %cst_3 [1] : vector<8x128xf32> to vector<8xf32>
    %60 = vector.shape_cast %59 : vector<8xf32> to vector<8x1xf32>
    %cst_4 = arith.constant 3.125000e-02 : f32
    %61 = vector.broadcast %cst_4 : f32 to vector<8x1xf32>
    %62 = arith.mulf %60, %61 : vector<8x1xf32>
    %63 = vector.broadcast %62 : vector<8x1xf32> to vector<8x128xf32>
    %64 = arith.subf %58, %63 : vector<8x128xf32>
    %65 = arith.mulf %64, %64 : vector<8x128xf32>
    %cst_5 = arith.constant dense<0.000000e+00> : vector<8xf32>
    %66 = vector.multi_reduction <add>, %65, %cst_5 [1] : vector<8x128xf32> to vector<8xf32>
    %67 = vector.shape_cast %66 : vector<8xf32> to vector<8x1xf32>
    %cst_6 = arith.constant 9.600000e+01 : f32
    %68 = vector.broadcast %cst_6 : f32 to vector<8x1xf32>
    %69 = arith.mulf %68, %62 : vector<8x1xf32>
    %70 = arith.mulf %69, %62 : vector<8x1xf32>
    %71 = arith.subf %67, %70 : vector<8x1xf32>
    %cst_7 = arith.constant 3.125000e-02 : f32
    %72 = vector.broadcast %cst_7 : f32 to vector<8x1xf32>
    %73 = arith.mulf %71, %72 : vector<8x1xf32>
    %cst_8 = arith.constant 9.99999996E-13 : f32
    %74 = vector.broadcast %cst_8 : f32 to vector<8x1xf32>
    %75 = arith.addf %73, %74 : vector<8x1xf32>
    %76 = math.rsqrt %75 : vector<8x1xf32>
    %77 = vector.broadcast %76 : vector<8x1xf32> to vector<8x128xf32>
    %78 = arith.mulf %64, %77 : vector<8x128xf32>
    %c0_9 = arith.constant 0 : index
    %c0_10 = arith.constant 0 : index
    %79 = vector.load %arg3[%c0_9, %c0_10] : memref<1x128xf32, #tpu.memory_space<vmem>>, vector<1x128xf32>
    %80 = vector.broadcast %79 : vector<1x128xf32> to vector<8x128xf32>
    %81 = arith.mulf %78, %80 : vector<8x128xf32>
    %c0_11 = arith.constant 0 : index
    %c0_12 = arith.constant 0 : index
    %82 = vector.load %arg4[%c0_11, %c0_12] : memref<1x128xf32, #tpu.memory_space<vmem>>, vector<1x128xf32>
    %83 = vector.broadcast %82 : vector<1x128xf32> to vector<8x128xf32>
    %84 = arith.addf %81, %83 : vector<8x128xf32>
    %c0_13 = arith.constant 0 : index
    %c0_14 = arith.constant 0 : index
    %85 = vector.load %arg5[%c0_13, %c0_14] : memref<8x128xf32, #tpu.memory_space<vmem>>, vector<8x128xf32>
    tpu.vector_store %arg5[%c0_13, %c0_14], %84 {strides = array<i32>} : memref<8x128xf32, #tpu.memory_space<vmem>>, vector<8x128xf32>,
    return
  }
  func.func @transform_0(%arg0: i32) -> (i32, i32) {
    %c0_i32 = arith.constant 0 : i32
    %c0_i32_0 = arith.constant 0 : i32
    return %arg0, %c0_i32 : i32, i32
  }
  func.func @transform_1(%arg0: i32) -> (i32, i32) {
    %c0_i32 = arith.constant 0 : i32
    %c0_i32_0 = arith.constant 0 : i32
    %c0_i32_1 = arith.constant 0 : i32
    return %c0_i32, %c0_i32_0 : i32, i32
  }
  func.func @transform_2(%arg0: i32) -> (i32, i32) {
    %c0_i32 = arith.constant 0 : i32
    %c0_i32_0 = arith.constant 0 : i32
    %c0_i32_1 = arith.constant 0 : i32
    return %c0_i32, %c0_i32_0 : i32, i32
  }
  func.func @transform_3(%arg0: i32) -> (i32, i32) {
    %c0_i32 = arith.constant 0 : i32
    %c0_i32_0 = arith.constant 0 : i32
    %c0_i32_1 = arith.constant 0 : i32
    return %c0_i32, %c0_i32_0 : i32, i32
  }
  func.func @transform_4(%arg0: i32) -> (i32, i32) {
    %c0_i32 = arith.constant 0 : i32
    %c0_i32_0 = arith.constant 0 : i32
    return %arg0, %c0_i32 : i32, i32
  }
}

</mosaic_0001>

<llo_original>
// kernel: tpu_custom_call.1
$region0: #{tpu_custom_call.1}
  #allocation0 [shape = 'u32[]', space=smem, size = 0x4, offset = 0x4, fixed_abs, tag = 'smem constant byte address 0x4 - core index']
  #allocation1 [shape = 'u32[72,128]{1,0:T(1,128)}', space=vmem, size = 0x9000, scoped, tag = 'internal scratch']
  %s0 = inlined_call_operand.hbm [shape: s32[16,9], index: 0, kind: input, shape index: {}]
  %s1 = inlined_call_operand.hbm [shape: bf16[1152,128], index: 1, kind: input, shape index: {}]
  %s2 = inlined_call_operand.vmem [shape: f32[1,128], index: 2, kind: input, shape index: {}]
  %s3 = inlined_call_operand.vmem [shape: f32[1,128], index: 3, kind: input, shape index: {}]
  %s4 = inlined_call_operand.hbm [shape: f32[16,128], index: 4, kind: output, shape index: {}]
  %s5 = sld [smem:[#allocation0]]
  $region57: #{tpu_custom_call.1} parent=0
    _
  %s7 = ssub.s32 1, %s5
  %s8 = scalar_select 0, %s7, %s5
  $region1: #{tpu_custom_call.1} parent=0
    #allocation2 [shape = 'u8[8192]{0}', space=vmem, size = 0x2000, scoped, tag = 'input window, operand 0']
    #allocation3 [shape = 's32[2]{0}', space=sflag, size = 0x8, scoped, tag = 'scoped memory for tpu_custom_call.1']
    #allocation4 [shape = 's32[2]{0}', space=sflag, size = 0x8, scoped, tag = 'scoped memory for tpu_custom_call.1']
    #allocation5 [shape = 'u8[294912]{0}', space=vmem, size = 0x48000, scoped, tag = 'input window, operand 1, single buffered']
    #allocation6 [shape = 's32[1]{0}', space=sflag, size = 0x4, scoped, tag = 'scoped memory for tpu_custom_call.1']
    #allocation7 [shape = 'u8[8192]{0}', space=vmem, size = 0x2000, scoped, tag = 'output window, operand 0']
    %9 = vsyncpa [#allocation3], 0
    %s10 = scalar_lea.sflag [#allocation3], 1
    %11 = vsyncpa %s10, 0
    %12 = vsyncpa [#allocation6], 0
    %13 = vsyncpa [#allocation4], 0
    %s14 = scalar_lea.sflag [#allocation4], 1
    %15 = vsyncpa %s14, 0
    loop: start=0, step=1, limit=4
    $region2: #{tpu_custom_call.1} parent=1 // loop_pre_header
      _
    $region3: #{tpu_custom_call.1} parent=1 // loop_header
      %s17 = sphi 0, %s21
      %p18 = scmp.ge.s32.totalorder %s17, 4
      %s27 = sphi 0, %s29
      %s30 = sphi 0, %s27
      %s31 = sphi 0, %s30
      %s47 = sphi 0, %s31
      %s51 = sphi 0, %s51
      %s53 = sphi 0, %s51
      %s54 = sphi 0, %s53
      %s68 = sphi 0, %s54
      %s72 = sphi 0, %s72
      %s74 = sphi 0, %s72
      %s75 = sphi 0, %s74
      %s89 = sphi 0, %s75
      %s93 = sphi 0, %s93
      %s95 = sphi 0, %s93
      %s96 = sphi 0, %s95
      %s110 = sphi 0, %s96
      %s116 = sphi 0, %s118
      %s119 = sphi 0, %s116
      %s120 = sphi 0, %s119
      %s136 = sphi 0, %s120
    $region4: #{tpu_custom_call.1} parent=1 // loop_header_branch
      %20 = sbr.rel (%p18) target = $region8
    $region5: #{tpu_custom_call.1} parent=1 // loop_body
      %s22 = ssub.s32 %s17, 1
      %s23 = ssub.s32 %s17, 2
      %s24 = sadd.s32 %s17, 1
      %s25 = ssub.s32 %s17, %s24
      %p26 = scmp.eq.s32.totalorder %s25, 0
      %s28 = sadd.s32 %s27, 1
      %s29 = scalar_select %p26, %s27, %s28
      %p32 = pneg %p26
      %p33 = scmp.eq.s32.totalorder %s17, 1
      %p34 = por %p32, %p33
      %p35 = scmp.ne.s32.totalorder %s27, %s30
      %p36 = scmp.eq.s32.totalorder %s17, 0
      %p37 = por %p35, %p36
      %p38 = scmp.ne.s32.totalorder %s27, %s30
      %p39 = scmp.eq.s32.totalorder %s22, 1
      %p40 = por %p38, %p39
      %p41 = scmp.ne.s32.totalorder %s30, %s31
      %p42 = scmp.eq.s32.totalorder %s22, 0
      %p43 = por %p41, %p42
      %p44 = scmp.ne.s32.totalorder %s30, %s31
      %p45 = scmp.eq.s32.totalorder %s23, 1
      %p46 = por %p44, %p45
      %p48 = scmp.ne.s32.totalorder %s31, %s47
      %p49 = scmp.eq.s32.totalorder %s23, 0
      %p50 = por %p48, %p49
      %s52 = sadd.s32 %s51, 1
      %p55 = scmp.eq.s32.totalorder %s17, 1
      %p56 = scmp.ne.s32.totalorder %s51, %s53
      %p57 = scmp.eq.s32.totalorder %s17, 0
      %p58 = por %p56, %p57
      %p59 = scmp.ne.s32.totalorder %s51, %s53
      %p60 = scmp.eq.s32.totalorder %s22, 1
      %p61 = por %p59, %p60
      %p62 = scmp.ne.s32.totalorder %s53, %s54
      %p63 = scmp.eq.s32.totalorder %s22, 0
      %p64 = por %p62, %p63
      %p65 = scmp.ne.s32.totalorder %s53, %s54
      %p66 = scmp.eq.s32.totalorder %s23, 1
      %p67 = por %p65, %p66
      %p69 = scmp.ne.s32.totalorder %s54, %s68
      %p70 = scmp.eq.s32.totalorder %s23, 0
      %p71 = por %p69, %p70
      %s73 = sadd.s32 %s72, 1
      %p76 = scmp.eq.s32.totalorder %s17, 1
      %p77 = scmp.ne.s32.totalorder %s72, %s74
      %p78 = scmp.eq.s32.totalorder %s17, 0
      %p79 = por %p77, %p78
      %p80 = scmp.ne.s32.totalorder %s72, %s74
      %p81 = scmp.eq.s32.totalorder %s22, 1
      %p82 = por %p80, %p81
      %p83 = scmp.ne.s32.totalorder %s74, %s75
      %p84 = scmp.eq.s32.totalorder %s22, 0
      %p85 = por %p83, %p84
      %p86 = scmp.ne.s32.totalorder %s74, %s75
      %p87 = scmp.eq.s32.totalorder %s23, 1
      %p88 = por %p86, %p87
      %p90 = scmp.ne.s32.totalorder %s75, %s89
      %p91 = scmp.eq.s32.totalorder %s23, 0
      %p92 = por %p90, %p91
      %s94 = sadd.s32 %s93, 1
      %p97 = scmp.eq.s32.totalorder %s17, 1
      %p98 = scmp.ne.s32.totalorder %s93, %s95
      %p99 = scmp.eq.s32.totalorder %s17, 0
      %p100 = por %p98, %p99
      %p101 = scmp.ne.s32.totalorder %s93, %s95
      %p102 = scmp.eq.s32.totalorder %s22, 1
      %p103 = por %p101, %p102
      %p104 = scmp.ne.s32.totalorder %s95, %s96
      %p105 = scmp.eq.s32.totalorder %s22, 0
      %p106 = por %p104, %p105
      %p107 = scmp.ne.s32.totalorder %s95, %s96
      %p108 = scmp.eq.s32.totalorder %s23, 1
      %p109 = por %p107, %p108
      %p111 = scmp.ne.s32.totalorder %s96, %s110
      %p112 = scmp.eq.s32.totalorder %s23, 0
      %p113 = por %p111, %p112
      %s114 = ssub.s32 %s17, %s24
      %p115 = scmp.eq.s32.totalorder %s114, 0
      %s117 = sadd.s32 %s116, 1
      %s118 = scalar_select %p115, %s116, %s117
      %p121 = pneg %p115
      %p122 = scmp.eq.s32.totalorder %s17, 1
      %p123 = por %p121, %p122
      %p124 = scmp.ne.s32.totalorder %s116, %s119
      %p125 = scmp.eq.s32.totalorder %s17, 0
      %p126 = por %p124, %p125
      %p127 = scmp.ne.s32.totalorder %s116, %s119
      %p128 = scmp.eq.s32.totalorder %s22, 1
      %p129 = por %p127, %p128
      %p130 = scmp.ne.s32.totalorder %s119, %s120
      %p131 = scmp.eq.s32.totalorder %s22, 0
      %p132 = por %p130, %p131
      %p133 = scmp.ne.s32.totalorder %s119, %s120
      %p134 = scmp.eq.s32.totalorder %s23, 1
      %p135 = por %p133, %p134
      %p137 = scmp.ne.s32.totalorder %s120, %s136
      %p138 = scmp.eq.s32.totalorder %s23, 0
      %p139 = por %p137, %p138
      %p140 = scmp.le.s32.totalorder 1, %s17
      %p141 = scmp.lt.s32.totalorder %s17, 3
      %p142 = pnand %p140, %p141
      %p143 = pneg %p142
      // Predicated region
      $region9: #{tpu_custom_call.1} parent=5 // pred_check
        _
      $region10: #{tpu_custom_call.1} parent=5 // pred_check_branch
        %145 = sbr.rel (%p142) target = $region12
      $region11: #{tpu_custom_call.1} parent=5 // pred_region
        %s146 = ssub.s32 %s17, 1
        // Predicated region
        $region13: #{tpu_custom_call.1} parent=11 // pred_check
          %p147 = pneg %p64
        $region14: #{tpu_custom_call.1} parent=11 // pred_check_branch
          %149 = sbr.rel (%p147) target = $region16
        $region15: #{tpu_custom_call.1} parent=11 // pred_region
          %151 = vsyncadd [#allocation6], 0
          %s152 = sshll.u32 %s1, 4
          %s153 = int_to_ptr.hbm [resolvable:$true] %s152
          %s154 = sshll.u32 [#allocation5], 4
          %s155 = int_to_ptr.vmem [resolvable:$true] %s154
          %160 = dma.hbm_to_vmem [thread:$0]  %s153, 9216, %s155, [#allocation6], 64, 64, 4
        $region16: #{tpu_custom_call.1} parent=11 // pred_fallthru
          _
        // Predicated region
        $region17: #{tpu_custom_call.1} parent=11 // pred_check
          %p161 = pneg %p85
        $region18: #{tpu_custom_call.1} parent=11 // pred_check_branch
          %163 = sbr.rel (%p161) target = $region20
        $region19: #{tpu_custom_call.1} parent=11 // pred_region
          _
        $region20: #{tpu_custom_call.1} parent=11 // pred_fallthru
          _
        // Predicated region
        $region21: #{tpu_custom_call.1} parent=11 // pred_check
          %p164 = pneg %p106
        $region22: #{tpu_custom_call.1} parent=11 // pred_check_branch
          %166 = sbr.rel (%p164) target = $region24
        $region23: #{tpu_custom_call.1} parent=11 // pred_region
          _
        $region24: #{tpu_custom_call.1} parent=11 // pred_fallthru
          _
      $region12: #{tpu_custom_call.1} parent=5 // pred_fallthru
        _
      %p167 = scmp.lt.s32.totalorder %s17, 2
      // Predicated region
      $region25: #{tpu_custom_call.1} parent=5 // pred_check
        %p168 = pneg %p167
      $region26: #{tpu_custom_call.1} parent=5 // pred_check_branch
        %170 = sbr.rel (%p168) target = $region28
      $region27: #{tpu_custom_call.1} parent=5 // pred_region
        // Predicated region
        $region29: #{tpu_custom_call.1} parent=27 // pred_check
          %p171 = pneg %p37
        $region30: #{tpu_custom_call.1} parent=27 // pred_check_branch
          %173 = sbr.rel (%p171) target = $region32
        $region31: #{tpu_custom_call.1} parent=27 // pred_region
          %s174 = sand.u32 %s27, 1
          %s175 = scalar_lea.sflag [#allocation3], %s174
          %s176 = sand.u32 %s27, 1
          %s177 = smul.addr %s176, 8
          %s178 = scalar_lea.vmem [#allocation2], %s177
          %180 = vsyncadd %s175, 0
          %s181 = smul.addr %s17, 8
          %s182 = scalar_lea.hbm %s0, %s181
          %s184 = sshll.u32 %s182, 4
          %s185 = int_to_ptr.hbm [resolvable:$true] %s184
          %s186 = sshll.u32 %s178, 4
          %s187 = int_to_ptr.vmem [resolvable:$true] %s186
          %189 = dma.hbm_to_vmem [thread:$0]  %s185, 128, %s187, %s175
        $region32: #{tpu_custom_call.1} parent=27 // pred_fallthru
          _
      $region28: #{tpu_custom_call.1} parent=5 // pred_fallthru
        _
      %p190 = scmp.le.s32.totalorder 1, %s17
      %p191 = scmp.lt.s32.totalorder %s17, 3
      %p192 = pnand %p190, %p191
      %p193 = pneg %p192
      // Predicated region
      $region33: #{tpu_custom_call.1} parent=5 // pred_check
        _
      $region34: #{tpu_custom_call.1} parent=5 // pred_check_branch
        %195 = sbr.rel (%p192) target = $region36
      $region35: #{tpu_custom_call.1} parent=5 // pred_region
        %s196 = ssub.s32 %s17, 1
        %s197 = sand.u32 %s30, 1
        %s198 = scalar_lea.sflag [#allocation3], %s197
        %s199 = sand.u32 %s30, 1
        %s200 = smul.addr %s199, 8
        %s201 = scalar_lea.vmem [#allocation2], %s200
        // Predicated region
        $region37: #{tpu_custom_call.1} parent=35 // pred_check
          %p202 = pneg %p43
        $region38: #{tpu_custom_call.1} parent=35 // pred_check_branch
          %204 = sbr.rel (%p202) target = $region40
        $region39: #{tpu_custom_call.1} parent=35 // pred_region
          %206 = dma.done %s198, 128
        $region40: #{tpu_custom_call.1} parent=35 // pred_fallthru
          _
        // Predicated region
        $region41: #{tpu_custom_call.1} parent=35 // pred_check
          %p207 = pneg %p64
        $region42: #{tpu_custom_call.1} parent=35 // pred_check_branch
          %209 = sbr.rel (%p207) target = $region44
        $region43: #{tpu_custom_call.1} parent=35 // pred_region
          %211 = dma.done [#allocation6], 9216
        $region44: #{tpu_custom_call.1} parent=35 // pred_fallthru
          _
        %s212 = sand.u32 %s30, 1
        %s213 = scalar_lea.sflag [#allocation3], %s212
        %s214 = sand.u32 %s30, 1
        %s215 = smul.addr %s214, 8
        %s216 = scalar_lea.vmem [#allocation2], %s215
        %p217 = pneg %p43
        %p218 = pneg %p40
        %p219 = pneg %p64
        %p220 = pneg %p61
        %p221 = pneg %p85
        %p222 = pneg %p82
        %p223 = pneg %p106
        %p224 = pneg %p103
        %p225 = pneg %p132
        %p226 = pneg %p129
        %s227 = sand.u32 %s119, 1
        %s228 = scalar_lea.sflag [#allocation4], %s227
        %s229 = sand.u32 %s119, 1
        %s230 = smul.addr %s229, 8
        %s231 = scalar_lea.vmem [#allocation7], %s230
        %v232 = vld [vmem:[%s201] sm:$0xff]
        %v233 = vlaneseq
        %v234 = vand.u32 %v233, 127
        %235 = vset.pattern.permute.xlu0 0
        %236 = vperm.xlu0 %235, %v232
        %v237 = vpop.permute.xlu0 %236
        %vm238 = vcmp.eq.s32.totalorder %v234, %v237
        %v239 = vsel %vm238, 1, 0
        %v240 = vcvt.s32.f32 %v239
        %v241 = vpack.c.bf16 %v240, %v240
        %242 = vset.pattern.permute.xlu0 1
        %243 = vperm.xlu0 %242, %v232
        %v244 = vpop.permute.xlu0 %243
        %vm245 = vcmp.eq.s32.totalorder %v234, %v244
        %v246 = vsel %vm245, 1, 0
        %v247 = vcvt.s32.f32 %v246
        %v248 = vpack.c.bf16 %v247, %v247
        %249 = vset.pattern.permute.xlu0 2
        %250 = vperm.xlu0 %249, %v232
        %v251 = vpop.permute.xlu0 %250
        %vm252 = vcmp.eq.s32.totalorder %v234, %v251
        %v253 = vsel %vm252, 1, 0
        %v254 = vcvt.s32.f32 %v253
        %v255 = vpack.c.bf16 %v254, %v254
        %256 = vset.pattern.permute.xlu0 3
        %257 = vperm.xlu0 %256, %v232
        %v258 = vpop.permute.xlu0 %257
        %vm259 = vcmp.eq.s32.totalorder %v234, %v258
        %v260 = vsel %vm259, 1, 0
        %v261 = vcvt.s32.f32 %v260
        %v262 = vpack.c.bf16 %v261, %v261
        %263 = vset.pattern.permute.xlu0 4
        %264 = vperm.xlu0 %263, %v232
        %v265 = vpop.permute.xlu0 %264
        %vm266 = vcmp.eq.s32.totalorder %v234, %v265
        %v267 = vsel %vm266, 1, 0
        %v268 = vcvt.s32.f32 %v267
        %v269 = vpack.c.bf16 %v268, %v268
        %270 = vset.pattern.permute.xlu0 5
        %271 = vperm.xlu0 %270, %v232
        %v272 = vpop.permute.xlu0 %271
        %vm273 = vcmp.eq.s32.totalorder %v234, %v272
        %v274 = vsel %vm273, 1, 0
        %v275 = vcvt.s32.f32 %v274
        %v276 = vpack.c.bf16 %v275, %v275
        %277 = vset.pattern.permute.xlu0 6
        %278 = vperm.xlu0 %277, %v232
        %v279 = vpop.permute.xlu0 %278
        %vm280 = vcmp.eq.s32.totalorder %v234, %v279
        %v281 = vsel %vm280, 1, 0
        %v282 = vcvt.s32.f32 %v281
        %v283 = vpack.c.bf16 %v282, %v282
        %284 = vset.pattern.permute.xlu0 7
        %285 = vperm.xlu0 %284, %v232
        %v286 = vpop.permute.xlu0 %285
        %vm287 = vcmp.eq.s32.totalorder %v234, %v286
        %v288 = vsel %vm287, 1, 0
        %v289 = vcvt.s32.f32 %v288
        %v290 = vpack.c.bf16 %v289, %v289
        %291 = vset.pattern.permute.xlu0 8
        %292 = vperm.xlu0 %291, %v232
        %v293 = vpop.permute.xlu0 %292
        %vm294 = vcmp.eq.s32.totalorder %v234, %v293
        %v295 = vsel %vm294, 1, 0
        %v296 = vcvt.s32.f32 %v295
        %v297 = vpack.c.bf16 %v296, %v296
        %v298 = vld [vmem:[#allocation5] sm:$0xf]
        %v299 = vld [vmem:[#allocation5 + $0x4] sm:$0xf]
        %v300 = vld [vmem:[#allocation5 + $0x8] sm:$0xf]
        %v301 = vld [vmem:[#allocation5 + $0xc] sm:$0xf]
        %v302 = vld [vmem:[#allocation5 + $0x10] sm:$0xf]
        %v303 = vld [vmem:[#allocation5 + $0x14] sm:$0xf]
        %v304 = vld [vmem:[#allocation5 + $0x18] sm:$0xf]
        %v305 = vld [vmem:[#allocation5 + $0x1c] sm:$0xf]
        %v306 = vld [vmem:[#allocation5 + $0x20] sm:$0xf]
        %v307 = vld [vmem:[#allocation5 + $0x24] sm:$0xf]
        %v308 = vld [vmem:[#allocation5 + $0x28] sm:$0xf]
        %v309 = vld [vmem:[#allocation5 + $0x2c] sm:$0xf]
        %v310 = vld [vmem:[#allocation5 + $0x30] sm:$0xf]
        %v311 = vld [vmem:[#allocation5 + $0x34] sm:$0xf]
        %v312 = vld [vmem:[#allocation5 + $0x38] sm:$0xf]
        %v313 = vld [vmem:[#allocation5 + $0x3c] sm:$0xf]
        %v314 = vld [vmem:[#allocation5 + $0x40] sm:$0xf]
        %v315 = vld [vmem:[#allocation5 + $0x44] sm:$0xf]
        %v316 = vld [vmem:[#allocation5 + $0x48] sm:$0xf]
        %v317 = vld [vmem:[#allocation5 + $0x4c] sm:$0xf]
        %v318 = vld [vmem:[#allocation5 + $0x50] sm:$0xf]
        %v319 = vld [vmem:[#allocation5 + $0x54] sm:$0xf]
        %v320 = vld [vmem:[#allocation5 + $0x58] sm:$0xf]
        %v321 = vld [vmem:[#allocation5 + $0x5c] sm:$0xf]
        %v322 = vld [vmem:[#allocation5 + $0x60] sm:$0xf]
        %v323 = vld [vmem:[#allocation5 + $0x64] sm:$0xf]
        %v324 = vld [vmem:[#allocation5 + $0x68] sm:$0xf]
        %v325 = vld [vmem:[#allocation5 + $0x6c] sm:$0xf]
        %v326 = vld [vmem:[#allocation5 + $0x70] sm:$0xf]
        %v327 = vld [vmem:[#allocation5 + $0x74] sm:$0xf]
        %v328 = vld [vmem:[#allocation5 + $0x78] sm:$0xf]
        %v329 = vld [vmem:[#allocation5 + $0x7c] sm:$0xf]
        %v330 = vld [vmem:[#allocation5 + $0x80] sm:$0xf]
        %v331 = vld [vmem:[#allocation5 + $0x84] sm:$0xf]
        %v332 = vld [vmem:[#allocation5 + $0x88] sm:$0xf]
        %v333 = vld [vmem:[#allocation5 + $0x8c] sm:$0xf]
        %v334 = vld [vmem:[#allocation5 + $0x90] sm:$0xf]
        %v335 = vld [vmem:[#allocation5 + $0x94] sm:$0xf]
        %v336 = vld [vmem:[#allocation5 + $0x98] sm:$0xf]
        %v337 = vld [vmem:[#allocation5 + $0x9c] sm:$0xf]
        %v338 = vld [vmem:[#allocation5 + $0xa0] sm:$0xf]
        %v339 = vld [vmem:[#allocation5 + $0xa4] sm:$0xf]
        %v340 = vld [vmem:[#allocation5 + $0xa8] sm:$0xf]
        %v341 = vld [vmem:[#allocation5 + $0xac] sm:$0xf]
        %v342 = vld [vmem:[#allocation5 + $0xb0] sm:$0xf]
        %v343 = vld [vmem:[#allocation5 + $0xb4] sm:$0xf]
        %v344 = vld [vmem:[#allocation5 + $0xb8] sm:$0xf]
        %v345 = vld [vmem:[#allocation5 + $0xbc] sm:$0xf]
        %v346 = vld [vmem:[#allocation5 + $0xc0] sm:$0xf]
        %v347 = vld [vmem:[#allocation5 + $0xc4] sm:$0xf]
        %v348 = vld [vmem:[#allocation5 + $0xc8] sm:$0xf]
        %v349 = vld [vmem:[#allocation5 + $0xcc] sm:$0xf]
        %v350 = vld [vmem:[#allocation5 + $0xd0] sm:$0xf]
        %v351 = vld [vmem:[#allocation5 + $0xd4] sm:$0xf]
        %v352 = vld [vmem:[#allocation5 + $0xd8] sm:$0xf]
        %v353 = vld [vmem:[#allocation5 + $0xdc] sm:$0xf]
        %v354 = vld [vmem:[#allocation5 + $0xe0] sm:$0xf]
        %v355 = vld [vmem:[#allocation5 + $0xe4] sm:$0xf]
        %v356 = vld [vmem:[#allocation5 + $0xe8] sm:$0xf]
        %v357 = vld [vmem:[#allocation5 + $0xec] sm:$0xf]
        %v358 = vld [vmem:[#allocation5 + $0xf0] sm:$0xf]
        %v359 = vld [vmem:[#allocation5 + $0xf4] sm:$0xf]
        %v360 = vld [vmem:[#allocation5 + $0xf8] sm:$0xf]
        %v361 = vld [vmem:[#allocation5 + $0xfc] sm:$0xf]
        %v362 = vld [vmem:[#allocation5 + $0x100] sm:$0xf]
        %v363 = vld [vmem:[#allocation5 + $0x104] sm:$0xf]
        %v364 = vld [vmem:[#allocation5 + $0x108] sm:$0xf]
        %v365 = vld [vmem:[#allocation5 + $0x10c] sm:$0xf]
        %v366 = vld [vmem:[#allocation5 + $0x110] sm:$0xf]
        %v367 = vld [vmem:[#allocation5 + $0x114] sm:$0xf]
        %v368 = vld [vmem:[#allocation5 + $0x118] sm:$0xf]
        %v369 = vld [vmem:[#allocation5 + $0x11c] sm:$0xf]
        %v370 = vld [vmem:[#allocation5 + $0x120] sm:$0xf]
        %v371 = vld [vmem:[#allocation5 + $0x124] sm:$0xf]
        %v372 = vld [vmem:[#allocation5 + $0x128] sm:$0xf]
        %v373 = vld [vmem:[#allocation5 + $0x12c] sm:$0xf]
        %v374 = vld [vmem:[#allocation5 + $0x130] sm:$0xf]
        %v375 = vld [vmem:[#allocation5 + $0x134] sm:$0xf]
        %v376 = vld [vmem:[#allocation5 + $0x138] sm:$0xf]
        %v377 = vld [vmem:[#allocation5 + $0x13c] sm:$0xf]
        %v378 = vld [vmem:[#allocation5 + $0x140] sm:$0xf]
        %v379 = vld [vmem:[#allocation5 + $0x144] sm:$0xf]
        %v380 = vld [vmem:[#allocation5 + $0x148] sm:$0xf]
        %v381 = vld [vmem:[#allocation5 + $0x14c] sm:$0xf]
        %v382 = vld [vmem:[#allocation5 + $0x150] sm:$0xf]
        %v383 = vld [vmem:[#allocation5 + $0x154] sm:$0xf]
        %v384 = vld [vmem:[#allocation5 + $0x158] sm:$0xf]
        %v385 = vld [vmem:[#allocation5 + $0x15c] sm:$0xf]
        %v386 = vld [vmem:[#allocation5 + $0x160] sm:$0xf]
        %v387 = vld [vmem:[#allocation5 + $0x164] sm:$0xf]
        %v388 = vld [vmem:[#allocation5 + $0x168] sm:$0xf]
        %v389 = vld [vmem:[#allocation5 + $0x16c] sm:$0xf]
        %v390 = vld [vmem:[#allocation5 + $0x170] sm:$0xf]
        %v391 = vld [vmem:[#allocation5 + $0x174] sm:$0xf]
        %v392 = vld [vmem:[#allocation5 + $0x178] sm:$0xf]
        %v393 = vld [vmem:[#allocation5 + $0x17c] sm:$0xf]
        %v394 = vld [vmem:[#allocation5 + $0x180] sm:$0xf]
        %v395 = vld [vmem:[#allocation5 + $0x184] sm:$0xf]
        %v396 = vld [vmem:[#allocation5 + $0x188] sm:$0xf]
        %v397 = vld [vmem:[#allocation5 + $0x18c] sm:$0xf]
        %v398 = vld [vmem:[#allocation5 + $0x190] sm:$0xf]
        %v399 = vld [vmem:[#allocation5 + $0x194] sm:$0xf]
        %v400 = vld [vmem:[#allocation5 + $0x198] sm:$0xf]
        %v401 = vld [vmem:[#allocation5 + $0x19c] sm:$0xf]
        %v402 = vld [vmem:[#allocation5 + $0x1a0] sm:$0xf]
        %v403 = vld [vmem:[#allocation5 + $0x1a4] sm:$0xf]
        %v404 = vld [vmem:[#allocation5 + $0x1a8] sm:$0xf]
        %v405 = vld [vmem:[#allocation5 + $0x1ac] sm:$0xf]
        %v406 = vld [vmem:[#allocation5 + $0x1b0] sm:$0xf]
        %v407 = vld [vmem:[#allocation5 + $0x1b4] sm:$0xf]
        %v408 = vld [vmem:[#allocation5 + $0x1b8] sm:$0xf]
        %v409 = vld [vmem:[#allocation5 + $0x1bc] sm:$0xf]
        %v410 = vld [vmem:[#allocation5 + $0x1c0] sm:$0xf]
        %v411 = vld [vmem:[#allocation5 + $0x1c4] sm:$0xf]
        %v412 = vld [vmem:[#allocation5 + $0x1c8] sm:$0xf]
        %v413 = vld [vmem:[#allocation5 + $0x1cc] sm:$0xf]
        %v414 = vld [vmem:[#allocation5 + $0x1d0] sm:$0xf]
        %v415 = vld [vmem:[#allocation5 + $0x1d4] sm:$0xf]
        %v416 = vld [vmem:[#allocation5 + $0x1d8] sm:$0xf]
        %v417 = vld [vmem:[#allocation5 + $0x1dc] sm:$0xf]
        %v418 = vld [vmem:[#allocation5 + $0x1e0] sm:$0xf]
        %v419 = vld [vmem:[#allocation5 + $0x1e4] sm:$0xf]
        %v420 = vld [vmem:[#allocation5 + $0x1e8] sm:$0xf]
        %v421 = vld [vmem:[#allocation5 + $0x1ec] sm:$0xf]
        %v422 = vld [vmem:[#allocation5 + $0x1f0] sm:$0xf]
        %v423 = vld [vmem:[#allocation5 + $0x1f4] sm:$0xf]
        %v424 = vld [vmem:[#allocation5 + $0x1f8] sm:$0xf]
        %v425 = vld [vmem:[#allocation5 + $0x1fc] sm:$0xf]
        %v426 = vld [vmem:[#allocation5 + $0x200] sm:$0xf]
        %v427 = vld [vmem:[#allocation5 + $0x204] sm:$0xf]
        %v428 = vld [vmem:[#allocation5 + $0x208] sm:$0xf]
        %v429 = vld [vmem:[#allocation5 + $0x20c] sm:$0xf]
        %v430 = vld [vmem:[#allocation5 + $0x210] sm:$0xf]
        %v431 = vld [vmem:[#allocation5 + $0x214] sm:$0xf]
        %v432 = vld [vmem:[#allocation5 + $0x218] sm:$0xf]
        %v433 = vld [vmem:[#allocation5 + $0x21c] sm:$0xf]
        %v434 = vld [vmem:[#allocation5 + $0x220] sm:$0xf]
        %v435 = vld [vmem:[#allocation5 + $0x224] sm:$0xf]
        %v436 = vld [vmem:[#allocation5 + $0x228] sm:$0xf]
        %v437 = vld [vmem:[#allocation5 + $0x22c] sm:$0xf]
        %v438 = vld [vmem:[#allocation5 + $0x230] sm:$0xf]
        %v439 = vld [vmem:[#allocation5 + $0x234] sm:$0xf]
        %v440 = vld [vmem:[#allocation5 + $0x238] sm:$0xf]
        %v441 = vld [vmem:[#allocation5 + $0x23c] sm:$0xf]
        %v586 = vunpack.c.l.b16 %v298
        %v587 = vunpack.c.l.b16 %v299
        %v588 = vunpack.c.l.b16 %v300
        %v589 = vunpack.c.l.b16 %v301
        %v590 = vunpack.c.l.b16 %v302
        %v591 = vunpack.c.l.b16 %v303
        %v592 = vunpack.c.l.b16 %v304
        %v593 = vunpack.c.l.b16 %v305
        %v594 = vunpack.c.l.b16 %v306
        %v595 = vunpack.c.l.b16 %v307
        %v596 = vunpack.c.l.b16 %v308
        %v597 = vunpack.c.l.b16 %v309
        %v598 = vunpack.c.l.b16 %v310
        %v599 = vunpack.c.l.b16 %v311
        %v600 = vunpack.c.l.b16 %v312
        %v601 = vunpack.c.l.b16 %v313
        %v602 = vunpack.c.l.b16 %v314
        %v603 = vunpack.c.l.b16 %v315
        %v604 = vunpack.c.l.b16 %v316
        %v605 = vunpack.c.l.b16 %v317
        %v606 = vunpack.c.l.b16 %v318
        %v607 = vunpack.c.l.b16 %v319
        %v608 = vunpack.c.l.b16 %v320
        %v609 = vunpack.c.l.b16 %v321
        %v610 = vunpack.c.l.b16 %v322
        %v611 = vunpack.c.l.b16 %v323
        %v612 = vunpack.c.l.b16 %v324
        %v613 = vunpack.c.l.b16 %v325
        %v614 = vunpack.c.l.b16 %v326
        %v615 = vunpack.c.l.b16 %v327
        %v616 = vunpack.c.l.b16 %v328
        %v617 = vunpack.c.l.b16 %v329
        %v618 = vunpack.c.l.b16 %v330
        %v619 = vunpack.c.l.b16 %v331
        %v620 = vunpack.c.l.b16 %v332
        %v621 = vunpack.c.l.b16 %v333
        %v622 = vunpack.c.l.b16 %v334
        %v623 = vunpack.c.l.b16 %v335
        %v624 = vunpack.c.l.b16 %v336
        %v625 = vunpack.c.l.b16 %v337
        %v626 = vunpack.c.l.b16 %v338
        %v627 = vunpack.c.l.b16 %v339
        %v628 = vunpack.c.l.b16 %v340
        %v629 = vunpack.c.l.b16 %v341
        %v630 = vunpack.c.l.b16 %v342
        %v631 = vunpack.c.l.b16 %v343
        %v632 = vunpack.c.l.b16 %v344
        %v633 = vunpack.c.l.b16 %v345
        %v634 = vunpack.c.l.b16 %v346
        %v635 = vunpack.c.l.b16 %v347
        %v636 = vunpack.c.l.b16 %v348
        %v637 = vunpack.c.l.b16 %v349
        %v638 = vunpack.c.l.b16 %v350
        %v639 = vunpack.c.l.b16 %v351
        %v640 = vunpack.c.l.b16 %v352
        %v641 = vunpack.c.l.b16 %v353
        %v642 = vunpack.c.l.b16 %v354
        %v643 = vunpack.c.l.b16 %v355
        %v644 = vunpack.c.l.b16 %v356
        %v645 = vunpack.c.l.b16 %v357
        %v646 = vunpack.c.l.b16 %v358
        %v647 = vunpack.c.l.b16 %v359
        %v648 = vunpack.c.l.b16 %v360
        %v649 = vunpack.c.l.b16 %v361
        %v650 = vunpack.c.l.b16 %v362
        %v651 = vunpack.c.l.b16 %v363
        %v652 = vunpack.c.l.b16 %v364
        %v653 = vunpack.c.l.b16 %v365
        %v654 = vunpack.c.l.b16 %v366
        %v655 = vunpack.c.l.b16 %v367
        %v656 = vunpack.c.l.b16 %v368
        %v657 = vunpack.c.l.b16 %v369
        %v658 = vunpack.c.l.b16 %v370
        %v659 = vunpack.c.l.b16 %v371
        %v660 = vunpack.c.l.b16 %v372
        %v661 = vunpack.c.l.b16 %v373
        %v662 = vunpack.c.l.b16 %v374
        %v663 = vunpack.c.l.b16 %v375
        %v664 = vunpack.c.l.b16 %v376
        %v665 = vunpack.c.l.b16 %v377
        %v666 = vunpack.c.l.b16 %v378
        %v667 = vunpack.c.l.b16 %v379
        %v668 = vunpack.c.l.b16 %v380
        %v669 = vunpack.c.l.b16 %v381
        %v670 = vunpack.c.l.b16 %v382
        %v671 = vunpack.c.l.b16 %v383
        %v672 = vunpack.c.l.b16 %v384
        %v673 = vunpack.c.l.b16 %v385
        %v674 = vunpack.c.l.b16 %v386
        %v675 = vunpack.c.l.b16 %v387
        %v676 = vunpack.c.l.b16 %v388
        %v677 = vunpack.c.l.b16 %v389
        %v678 = vunpack.c.l.b16 %v390
        %v679 = vunpack.c.l.b16 %v391
        %v680 = vunpack.c.l.b16 %v392
        %v681 = vunpack.c.l.b16 %v393
        %v682 = vunpack.c.l.b16 %v394
        %v683 = vunpack.c.l.b16 %v395
        %v684 = vunpack.c.l.b16 %v396
        %v685 = vunpack.c.l.b16 %v397
        %v686 = vunpack.c.l.b16 %v398
        %v687 = vunpack.c.l.b16 %v399
        %v688 = vunpack.c.l.b16 %v400
        %v689 = vunpack.c.l.b16 %v401
        %v690 = vunpack.c.l.b16 %v402
        %v691 = vunpack.c.l.b16 %v403
        %v692 = vunpack.c.l.b16 %v404
        %v693 = vunpack.c.l.b16 %v405
        %v694 = vunpack.c.l.b16 %v406
        %v695 = vunpack.c.l.b16 %v407
        %v696 = vunpack.c.l.b16 %v408
        %v697 = vunpack.c.l.b16 %v409
        %v698 = vunpack.c.l.b16 %v410
        %v699 = vunpack.c.l.b16 %v411
        %v700 = vunpack.c.l.b16 %v412
        %v701 = vunpack.c.l.b16 %v413
        %v702 = vunpack.c.l.b16 %v414
        %v703 = vunpack.c.l.b16 %v415
        %v704 = vunpack.c.l.b16 %v416
        %v705 = vunpack.c.l.b16 %v417
        %v706 = vunpack.c.l.b16 %v418
        %v707 = vunpack.c.l.b16 %v419
        %v708 = vunpack.c.l.b16 %v420
        %v709 = vunpack.c.l.b16 %v421
        %v710 = vunpack.c.l.b16 %v422
        %v711 = vunpack.c.l.b16 %v423
        %v712 = vunpack.c.l.b16 %v424
        %v713 = vunpack.c.l.b16 %v425
        %v714 = vunpack.c.l.b16 %v426
        %v715 = vunpack.c.l.b16 %v427
        %v716 = vunpack.c.l.b16 %v428
        %v717 = vunpack.c.l.b16 %v429
        %v718 = vunpack.c.l.b16 %v430
        %v719 = vunpack.c.l.b16 %v431
        %v720 = vunpack.c.l.b16 %v432
        %v721 = vunpack.c.l.b16 %v433
        %v722 = vunpack.c.l.b16 %v434
        %v723 = vunpack.c.l.b16 %v435
        %v724 = vunpack.c.l.b16 %v436
        %v725 = vunpack.c.l.b16 %v437
        %v726 = vunpack.c.l.b16 %v438
        %v727 = vunpack.c.l.b16 %v439
        %v728 = vunpack.c.l.b16 %v440
        %v729 = vunpack.c.l.b16 %v441
        %v730 = vpack.c.b16 %v587, %v586
        %v731 = vpack.c.b16 %v589, %v588
        %v732 = vpack.c.b16 %v591, %v590
        %v733 = vpack.c.b16 %v593, %v592
        %v734 = vpack.c.b16 %v595, %v594
        %v735 = vpack.c.b16 %v597, %v596
        %v736 = vpack.c.b16 %v599, %v598
        %v737 = vpack.c.b16 %v601, %v600
        %v738 = vpack.c.b16 %v603, %v602
        %v739 = vpack.c.b16 %v605, %v604
        %v740 = vpack.c.b16 %v607, %v606
        %v741 = vpack.c.b16 %v609, %v608
        %v742 = vpack.c.b16 %v611, %v610
        %v743 = vpack.c.b16 %v613, %v612
        %v744 = vpack.c.b16 %v615, %v614
        %v745 = vpack.c.b16 %v617, %v616
        %v746 = vpack.c.b16 %v619, %v618
        %v747 = vpack.c.b16 %v621, %v620
        %v748 = vpack.c.b16 %v623, %v622
        %v749 = vpack.c.b16 %v625, %v624
        %v750 = vpack.c.b16 %v627, %v626
        %v751 = vpack.c.b16 %v629, %v628
        %v752 = vpack.c.b16 %v631, %v630
        %v753 = vpack.c.b16 %v633, %v632
        %v754 = vpack.c.b16 %v635, %v634
        %v755 = vpack.c.b16 %v637, %v636
        %v756 = vpack.c.b16 %v639, %v638
        %v757 = vpack.c.b16 %v641, %v640
        %v758 = vpack.c.b16 %v643, %v642
        %v759 = vpack.c.b16 %v645, %v644
        %v760 = vpack.c.b16 %v647, %v646
        %v761 = vpack.c.b16 %v649, %v648
        %v762 = vpack.c.b16 %v651, %v650
        %v763 = vpack.c.b16 %v653, %v652
        %v764 = vpack.c.b16 %v655, %v654
        %v765 = vpack.c.b16 %v657, %v656
        %v766 = vpack.c.b16 %v659, %v658
        %v767 = vpack.c.b16 %v661, %v660
        %v768 = vpack.c.b16 %v663, %v662
        %v769 = vpack.c.b16 %v665, %v664
        %v770 = vpack.c.b16 %v667, %v666
        %v771 = vpack.c.b16 %v669, %v668
        %v772 = vpack.c.b16 %v671, %v670
        %v773 = vpack.c.b16 %v673, %v672
        %v774 = vpack.c.b16 %v675, %v674
        %v775 = vpack.c.b16 %v677, %v676
        %v776 = vpack.c.b16 %v679, %v678
        %v777 = vpack.c.b16 %v681, %v680
        %v778 = vpack.c.b16 %v683, %v682
        %v779 = vpack.c.b16 %v685, %v684
        %v780 = vpack.c.b16 %v687, %v686
        %v781 = vpack.c.b16 %v689, %v688
        %v782 = vpack.c.b16 %v691, %v690
        %v783 = vpack.c.b16 %v693, %v692
        %v784 = vpack.c.b16 %v695, %v694
        %v785 = vpack.c.b16 %v697, %v696
        %v786 = vpack.c.b16 %v699, %v698
        %v787 = vpack.c.b16 %v701, %v700
        %v788 = vpack.c.b16 %v703, %v702
        %v789 = vpack.c.b16 %v705, %v704
        %v790 = vpack.c.b16 %v707, %v706
        %v791 = vpack.c.b16 %v709, %v708
        %v792 = vpack.c.b16 %v711, %v710
        %v793 = vpack.c.b16 %v713, %v712
        %v794 = vpack.c.b16 %v715, %v714
        %v795 = vpack.c.b16 %v717, %v716
        %v796 = vpack.c.b16 %v719, %v718
        %v797 = vpack.c.b16 %v721, %v720
        %v798 = vpack.c.b16 %v723, %v722
        %v799 = vpack.c.b16 %v725, %v724
        %v800 = vpack.c.b16 %v727, %v726
        %v801 = vpack.c.b16 %v729, %v728
        %874 = vmatpush.bf16.msra.mxu0 %v737
        %875 = vmatpush.bf16.msra.mxu0 %v736
        %876 = vmatpush.bf16.msra.mxu0 %v735
        %877 = vmatpush.bf16.msra.mxu0 %v734
        %878 = vmatpush.bf16.msra.mxu0 %v733
        %879 = vmatpush.bf16.msra.mxu0 %v732
        %880 = vmatpush.bf16.msra.mxu0 %v731
        %881 = vmatpush.bf16.msra.mxu0 %v730
        %882 = vmatmul.bf16.gmra.mxu0 %v241
        %v883 = vpop.f32.mrf.mxu0
        %v884 = vadd.f32 0.0, %v883
        %v885 = vpop.f32.mrf.mxu0
        %886 = vdwg.mxu0
        %887 = vmatpush.bf16.msra.mxu0 %v745
        %888 = vmatpush.bf16.msra.mxu0 %v744
        %889 = vmatpush.bf16.msra.mxu0 %v743
        %890 = vmatpush.bf16.msra.mxu0 %v742
        %891 = vmatpush.bf16.msra.mxu0 %v741
        %892 = vmatpush.bf16.msra.mxu0 %v740
        %893 = vmatpush.bf16.msra.mxu0 %v739
        %894 = vmatpush.bf16.msra.mxu0 %v738
        %895 = vmatmul.bf16.gmra.mxu0 %v248
        %v896 = vpop.f32.mrf.mxu0
        %v897 = vadd.f32 %v884, %v896
        %v898 = vpop.f32.mrf.mxu0
        %899 = vdwg.mxu0
        %900 = vmatpush.bf16.msra.mxu0 %v753
        %901 = vmatpush.bf16.msra.mxu0 %v752
        %902 = vmatpush.bf16.msra.mxu0 %v751
        %903 = vmatpush.bf16.msra.mxu0 %v750
        %904 = vmatpush.bf16.msra.mxu0 %v749
        %905 = vmatpush.bf16.msra.mxu0 %v748
        %906 = vmatpush.bf16.msra.mxu0 %v747
        %907 = vmatpush.bf16.msra.mxu0 %v746
        %908 = vmatmul.bf16.gmra.mxu0 %v255
        %v909 = vpop.f32.mrf.mxu0
        %v910 = vadd.f32 %v897, %v909
        %v911 = vpop.f32.mrf.mxu0
        %912 = vdwg.mxu0
        %913 = vmatpush.bf16.msra.mxu0 %v761
        %914 = vmatpush.bf16.msra.mxu0 %v760
        %915 = vmatpush.bf16.msra.mxu0 %v759
        %916 = vmatpush.bf16.msra.mxu0 %v758
        %917 = vmatpush.bf16.msra.mxu0 %v757
        %918 = vmatpush.bf16.msra.mxu0 %v756
        %919 = vmatpush.bf16.msra.mxu0 %v755
        %920 = vmatpush.bf16.msra.mxu0 %v754
        %921 = vmatmul.bf16.gmra.mxu0 %v262
        %v922 = vpop.f32.mrf.mxu0
        %v923 = vadd.f32 %v910, %v922
        %v924 = vpop.f32.mrf.mxu0
        %925 = vdwg.mxu0
        %926 = vmatpush.bf16.msra.mxu0 %v769
        %927 = vmatpush.bf16.msra.mxu0 %v768
        %928 = vmatpush.bf16.msra.mxu0 %v767
        %929 = vmatpush.bf16.msra.mxu0 %v766
        %930 = vmatpush.bf16.msra.mxu0 %v765
        %931 = vmatpush.bf16.msra.mxu0 %v764
        %932 = vmatpush.bf16.msra.mxu0 %v763
        %933 = vmatpush.bf16.msra.mxu0 %v762
        %934 = vmatmul.bf16.gmra.mxu0 %v269
        %v935 = vpop.f32.mrf.mxu0
        %v936 = vadd.f32 %v923, %v935
        %v937 = vpop.f32.mrf.mxu0
        %938 = vdwg.mxu0
        %939 = vmatpush.bf16.msra.mxu0 %v777
        %940 = vmatpush.bf16.msra.mxu0 %v776
        %941 = vmatpush.bf16.msra.mxu0 %v775
        %942 = vmatpush.bf16.msra.mxu0 %v774
        %943 = vmatpush.bf16.msra.mxu0 %v773
        %944 = vmatpush.bf16.msra.mxu0 %v772
        %945 = vmatpush.bf16.msra.mxu0 %v771
        %946 = vmatpush.bf16.msra.mxu0 %v770
        %947 = vmatmul.bf16.gmra.mxu0 %v276
        %v948 = vpop.f32.mrf.mxu0
        %v949 = vadd.f32 %v936, %v948
        %v950 = vpop.f32.mrf.mxu0
        %951 = vdwg.mxu0
        %952 = vmatpush.bf16.msra.mxu0 %v785
        %953 = vmatpush.bf16.msra.mxu0 %v784
        %954 = vmatpush.bf16.msra.mxu0 %v783
        %955 = vmatpush.bf16.msra.mxu0 %v782
        %956 = vmatpush.bf16.msra.mxu0 %v781
        %957 = vmatpush.bf16.msra.mxu0 %v780
        %958 = vmatpush.bf16.msra.mxu0 %v779
        %959 = vmatpush.bf16.msra.mxu0 %v778
        %960 = vmatmul.bf16.gmra.mxu0 %v283
        %v961 = vpop.f32.mrf.mxu0
        %v962 = vadd.f32 %v949, %v961
        %v963 = vpop.f32.mrf.mxu0
        %964 = vdwg.mxu0
        %965 = vmatpush.bf16.msra.mxu0 %v793
        %966 = vmatpush.bf16.msra.mxu0 %v792
        %967 = vmatpush.bf16.msra.mxu0 %v791
        %968 = vmatpush.bf16.msra.mxu0 %v790
        %969 = vmatpush.bf16.msra.mxu0 %v789
        %970 = vmatpush.bf16.msra.mxu0 %v788
        %971 = vmatpush.bf16.msra.mxu0 %v787
        %972 = vmatpush.bf16.msra.mxu0 %v786
        %973 = vmatmul.bf16.gmra.mxu0 %v290
        %v974 = vpop.f32.mrf.mxu0
        %v975 = vadd.f32 %v962, %v974
        %v976 = vpop.f32.mrf.mxu0
        %977 = vdwg.mxu0
        %978 = vmatpush.bf16.msra.mxu0 %v801
        %979 = vmatpush.bf16.msra.mxu0 %v800
        %980 = vmatpush.bf16.msra.mxu0 %v799
        %981 = vmatpush.bf16.msra.mxu0 %v798
        %982 = vmatpush.bf16.msra.mxu0 %v797
        %983 = vmatpush.bf16.msra.mxu0 %v796
        %984 = vmatpush.bf16.msra.mxu0 %v795
        %985 = vmatpush.bf16.msra.mxu0 %v794
        %986 = vmatmul.bf16.gmra.mxu0 %v297
        %v987 = vpop.f32.mrf.mxu0
        %v988 = vadd.f32 %v975, %v987
        %v989 = vpop.f32.mrf.mxu0
        %990 = vdwg.mxu0
        %991 = vadd.xlane.f32.xlu0 %v988
        %v992 = vpop.xlane.xlu0 %991
        %v993 = vmul.f32 %v992, 0.03125
        %v994 = vsub.f32 %v988, %v993
        %v995 = vmul.f32 %v994, %v994
        %996 = vadd.xlane.f32.xlu0 %v995
        %v997 = vpop.xlane.xlu0 %996
        %v998 = vmul.f32 %v993, 96.0
        %v999 = vmul.f32 %v998, %v993
        %v1000 = vsub.f32 %v997, %v999
        %v1001 = vmul.f32 %v1000, 0.03125
        %v1002 = vadd.f32 %v1001, 1e-12
        %v1003 = vrsqrt.pop %v1002
        %v1004 = vmul.f32 %v1003, %v1002
        %v1005 = vmul.f32 %v1004, %v1003
        %v1006 = vmul.f32 0.5, %v1005
        %v1007 = vsub.f32 1.5, %v1006
        %v1008 = vmul.f32 %v1003, %v1007
        %vm1009 = vweird.f32 %v1002
        %vm1010 = vweird.f32 %v1003
        %vm1011 = vmor %vm1009, %vm1010
        %v1012 = vsel %vm1011, %v1003, %v1008
        %v1013 = vmul.f32 %v994, %v1012
        %v1014 = vld [vmem:[%s2] sm:$0x1]
        %v1016 = vperm.slane %v1014, 0
        %v1018 = vmul.f32 %v1013, %v1016
        %v1019 = vld [vmem:[%s3] sm:$0x1]
        %v1021 = vperm.slane %v1019, 0
        %v1023 = vadd.f32 %v1018, %v1021
        %1024 = vst [vmem:[%s231] sm:$0xff] %v1023
        %s1025 = sand.u32 %s119, 1
        %s1026 = scalar_lea.sflag [#allocation4], %s1025
        %s1027 = sand.u32 %s119, 1
        %s1028 = smul.addr %s1027, 8
        %s1029 = scalar_lea.vmem [#allocation7], %s1028
        // Predicated region
        $region45: #{tpu_custom_call.1} parent=35 // pred_check
          %p1030 = pneg %p129
        $region46: #{tpu_custom_call.1} parent=35 // pred_check_branch
          %1032 = sbr.rel (%p1030) target = $region48
        $region47: #{tpu_custom_call.1} parent=35 // pred_region
          %1034 = vsyncadd %s1026, 0
          %s1035 = smul.addr %s22, 8
          %s1036 = scalar_lea.hbm %s4, %s1035
          %s1038 = sshll.u32 %s1029, 4
          %s1039 = int_to_ptr.vmem [resolvable:$true] %s1038
          %s1040 = sshll.u32 %s1036, 4
          %s1041 = int_to_ptr.hbm [resolvable:$true] %s1040
          %1043 = dma.vmem_to_hbm [thread:$0]  %s1039, 128, %s1041, %s1026
        $region48: #{tpu_custom_call.1} parent=35 // pred_fallthru
          _
      $region36: #{tpu_custom_call.1} parent=5 // pred_fallthru
        _
      %p1044 = scmp.le.s32.totalorder 2, %s17
      // Predicated region
      $region49: #{tpu_custom_call.1} parent=5 // pred_check
        %p1045 = pneg %p1044
      $region50: #{tpu_custom_call.1} parent=5 // pred_check_branch
        %1047 = sbr.rel (%p1045) target = $region52
      $region51: #{tpu_custom_call.1} parent=5 // pred_region
        %s1048 = ssub.s32 %s17, 2
        // Predicated region
        $region53: #{tpu_custom_call.1} parent=51 // pred_check
          %p1049 = pneg %p135
        $region54: #{tpu_custom_call.1} parent=51 // pred_check_branch
          %1051 = sbr.rel (%p1049) target = $region56
        $region55: #{tpu_custom_call.1} parent=51 // pred_region
          %s1052 = sand.u32 %s120, 1
          %s1053 = scalar_lea.sflag [#allocation4], %s1052
          %s1054 = sand.u32 %s120, 1
          %s1055 = smul.addr %s1054, 8
          %s1056 = scalar_lea.vmem [#allocation7], %s1055
          %1058 = dma.done %s1053, 128
        $region56: #{tpu_custom_call.1} parent=51 // pred_fallthru
          _
      $region52: #{tpu_custom_call.1} parent=5 // pred_fallthru
        _
    $region6: #{tpu_custom_call.1} parent=1 // loop_footer
      %s21 = sadd.s32 1, %s17
    $region7: #{tpu_custom_call.1} parent=1 // loop_footer_branch
      %16 = sbr.rel target = $region3
    $region8: #{tpu_custom_call.1} parent=1 // loop_exit
      _
    %1059 = vsyncpa [#allocation3], 1
    %s1060 = scalar_lea.sflag [#allocation3], 1
    %1061 = vsyncpa %s1060, 1
    %1062 = vsyncpa [#allocation6], 1
    %1063 = vsyncpa [#allocation4], 1
    %s1064 = scalar_lea.sflag [#allocation4], 1
    %1065 = vsyncpa %s1064, 1

// kernel: tpu_custom_call.1
$region0: #{tpu_custom_call.1}
  #allocation0 [shape = 'u32[]', space=smem, size = 0x4, offset = 0x4, fixed_abs, tag = 'smem constant byte address 0x4 - core index']
  #allocation1 [shape = 'u32[72,128]{1,0:T(1,128)}', space=vmem, size = 0x9000, scoped, tag = 'internal scratch']
  %s0 = inlined_call_operand.hbm [shape: s32[16,9], index: 0, kind: input, shape index: {}]
  %s1 = inlined_call_operand.hbm [shape: bf16[1152,128], index: 1, kind: input, shape index: {}]
  %s2 = inlined_call_operand.vmem [shape: f32[1,128], index: 2, kind: input, shape index: {}]
  %s3 = inlined_call_operand.vmem [shape: f32[1,128], index: 3, kind: input, shape index: {}]
  %s4 = inlined_call_operand.hbm [shape: f32[16,128], index: 4, kind: output, shape index: {}]
  %s5 = sld [smem:[#allocation0]]
  $region57: #{tpu_custom_call.1} parent=0
    _
  %s7 = ssub.s32 1, %s5
  %s8 = scalar_select 0, %s7, %s5
  $region1: #{tpu_custom_call.1} parent=0
    #allocation2 [shape = 'u8[8192]{0}', space=vmem, size = 0x2000, scoped, tag = 'input window, operand 0']
    #allocation3 [shape = 's32[2]{0}', space=sflag, size = 0x8, scoped, tag = 'scoped memory for tpu_custom_call.1']
    #allocation4 [shape = 's32[2]{0}', space=sflag, size = 0x8, scoped, tag = 'scoped memory for tpu_custom_call.1']
    #allocation5 [shape = 'u8[294912]{0}', space=vmem, size = 0x48000, scoped, tag = 'input window, operand 1, single buffered']
    #allocation6 [shape = 's32[1]{0}', space=sflag, size = 0x4, scoped, tag = 'scoped memory for tpu_custom_call.1']
    #allocation7 [shape = 'u8[8192]{0}', space=vmem, size = 0x2000, scoped, tag = 'output window, operand 0']
    %9 = vsyncpa [#allocation3], 0
    %s10 = scalar_lea.sflag [#allocation3], 1
    %11 = vsyncpa %s10, 0
    %12 = vsyncpa [#allocation6], 0
    %13 = vsyncpa [#allocation4], 0
    %s14 = scalar_lea.sflag [#allocation4], 1
    %15 = vsyncpa %s14, 0
    loop: start=0, step=1, limit=4
    $region2: #{tpu_custom_call.1} parent=1 // loop_pre_header
      _
    $region3: #{tpu_custom_call.1} parent=1 // loop_header
      %s17 = sphi 0, %s21
      %p18 = scmp.ge.s32.totalorder %s17, 4
      %s27 = sphi 0, %s29
      %s30 = sphi 0, %s27
      %s31 = sphi 0, %s30
      %s47 = sphi 0, %s31
      %s51 = sphi 0, %s51
      %s53 = sphi 0, %s51
      %s54 = sphi 0, %s53
      %s68 = sphi 0, %s54
      %s72 = sphi 0, %s72
      %s74 = sphi 0, %s72
      %s75 = sphi 0, %s74
      %s89 = sphi 0, %s75
      %s93 = sphi 0, %s93
      %s95 = sphi 0, %s93
      %s96 = sphi 0, %s95
      %s110 = sphi 0, %s96
      %s116 = sphi 0, %s118
      %s119 = sphi 0, %s116
      %s120 = sphi 0, %s119
      %s136 = sphi 0, %s120
    $region4: #{tpu_custom_call.1} parent=1 // loop_header_branch
      %20 = sbr.rel (%p18) target = $region8
    $region5: #{tpu_custom_call.1} parent=1 // loop_body
      %s22 = ssub.s32 %s17, 1
      %s23 = ssub.s32 %s17, 2
      %s24 = sadd.s32 %s17, 1
      %s25 = ssub.s32 %s17, %s24
      %p26 = scmp.eq.s32.totalorder %s25, 0
      %s28 = sadd.s32 %s27, 1
      %s29 = scalar_select %p26, %s27, %s28
      %p32 = pneg %p26
      %p33 = scmp.eq.s32.totalorder %s17, 1
      %p34 = por %p32, %p33
      %p35 = scmp.ne.s32.totalorder %s27, %s30
      %p36 = scmp.eq.s32.totalorder %s17, 0
      %p37 = por %p35, %p36
      %p38 = scmp.ne.s32.totalorder %s27, %s30
      %p39 = scmp.eq.s32.totalorder %s22, 1
      %p40 = por %p38, %p39
      %p41 = scmp.ne.s32.totalorder %s30, %s31
      %p42 = scmp.eq.s32.totalorder %s22, 0
      %p43 = por %p41, %p42
      %p44 = scmp.ne.s32.totalorder %s30, %s31
      %p45 = scmp.eq.s32.totalorder %s23, 1
      %p46 = por %p44, %p45
      %p48 = scmp.ne.s32.totalorder %s31, %s47
      %p49 = scmp.eq.s32.totalorder %s23, 0
      %p50 = por %p48, %p49
      %s52 = sadd.s32 %s51, 1
      %p55 = scmp.eq.s32.totalorder %s17, 1
      %p56 = scmp.ne.s32.totalorder %s51, %s53
      %p57 = scmp.eq.s32.totalorder %s17, 0
      %p58 = por %p56, %p57
      %p59 = scmp.ne.s32.totalorder %s51, %s53
      %p60 = scmp.eq.s32.totalorder %s22, 1
      %p61 = por %p59, %p60
      %p62 = scmp.ne.s32.totalorder %s53, %s54
      %p63 = scmp.eq.s32.totalorder %s22, 0
      %p64 = por %p62, %p63
      %p65 = scmp.ne.s32.totalorder %s53, %s54
      %p66 = scmp.eq.s32.totalorder %s23, 1
      %p67 = por %p65, %p66
      %p69 = scmp.ne.s32.totalorder %s54, %s68
      %p70 = scmp.eq.s32.totalorder %s23, 0
      %p71 = por %p69, %p70
      %s73 = sadd.s32 %s72, 1
      %p76 = scmp.eq.s32.totalorder %s17, 1
      %p77 = scmp.ne.s32.totalorder %s72, %s74
      %p78 = scmp.eq.s32.totalorder %s17, 0
      %p79 = por %p77, %p78
      %p80 = scmp.ne.s32.totalorder %s72, %s74
      %p81 = scmp.eq.s32.totalorder %s22, 1
      %p82 = por %p80, %p81
      %p83 = scmp.ne.s32.totalorder %s74, %s75
      %p84 = scmp.eq.s32.totalorder %s22, 0
      %p85 = por %p83, %p84
      %p86 = scmp.ne.s32.totalorder %s74, %s75
      %p87 = scmp.eq.s32.totalorder %s23, 1
      %p88 = por %p86, %p87
      %p90 = scmp.ne.s32.totalorder %s75, %s89
      %p91 = scmp.eq.s32.totalorder %s23, 0
      %p92 = por %p90, %p91
      %s94 = sadd.s32 %s93, 1
      %p97 = scmp.eq.s32.totalorder %s17, 1
      %p98 = scmp.ne.s32.totalorder %s93, %s95
      %p99 = scmp.eq.s32.totalorder %s17, 0
      %p100 = por %p98, %p99
      %p101 = scmp.ne.s32.totalorder %s93, %s95
      %p102 = scmp.eq.s32.totalorder %s22, 1
      %p103 = por %p101, %p102
      %p104 = scmp.ne.s32.totalorder %s95, %s96
      %p105 = scmp.eq.s32.totalorder %s22, 0
      %p106 = por %p104, %p105
      %p107 = scmp.ne.s32.totalorder %s95, %s96
      %p108 = scmp.eq.s32.totalorder %s23, 1
      %p109 = por %p107, %p108
      %p111 = scmp.ne.s32.totalorder %s96, %s110
      %p112 = scmp.eq.s32.totalorder %s23, 0
      %p113 = por %p111, %p112
      %s114 = ssub.s32 %s17, %s24
      %p115 = scmp.eq.s32.totalorder %s114, 0
      %s117 = sadd.s32 %s116, 1
      %s118 = scalar_select %p115, %s116, %s117
      %p121 = pneg %p115
      %p122 = scmp.eq.s32.totalorder %s17, 1
      %p123 = por %p121, %p122
      %p124 = scmp.ne.s32.totalorder %s116, %s119
      %p125 = scmp.eq.s32.totalorder %s17, 0
      %p126 = por %p124, %p125
      %p127 = scmp.ne.s32.totalorder %s116, %s119
      %p128 = scmp.eq.s32.totalorder %s22, 1
      %p129 = por %p127, %p128
      %p130 = scmp.ne.s32.totalorder %s119, %s120
      %p131 = scmp.eq.s32.totalorder %s22, 0
      %p132 = por %p130, %p131
      %p133 = scmp.ne.s32.totalorder %s119, %s120
      %p134 = scmp.eq.s32.totalorder %s23, 1
      %p135 = por %p133, %p134
      %p137 = scmp.ne.s32.totalorder %s120, %s136
      %p138 = scmp.eq.s32.totalorder %s23, 0
      %p139 = por %p137, %p138
      %p140 = scmp.le.s32.totalorder 1, %s17
      %p141 = scmp.lt.s32.totalorder %s17, 3
      %p142 = pnand %p140, %p141
      %p143 = pneg %p142
      // Predicated region
      $region9: #{tpu_custom_call.1} parent=5 // pred_check
        _
      $region10: #{tpu_custom_call.1} parent=5 // pred_check_branch
        %145 = sbr.rel (%p142) target = $region12
      $region11: #{tpu_custom_call.1} parent=5 // pred_region
        %s146 = ssub.s32 %s17, 1
        // Predicated region
        $region13: #{tpu_custom_call.1} parent=11 // pred_check
          %p147 = pneg %p64
        $region14: #{tpu_custom_call.1} parent=11 // pred_check_branch
          %149 = sbr.rel (%p147) target = $region16
        $region15: #{tpu_custom_call.1} parent=11 // pred_region
          %151 = vsyncadd [#allocation6], 0
          %s152 = sshll.u32 %s1, 4
          %s153 = int_to_ptr.hbm [resolvable:$true] %s152
          %s154 = sshll.u32 [#allocation5], 4
          %s155 = int_to_ptr.vmem [resolvable:$true] %s154
          %160 = dma.hbm_to_vmem [thread:$0]  %s153, 9216, %s155, [#allocation6], 64, 64, 4
        $region16: #{tpu_custom_call.1} parent=11 // pred_fallthru
          _
        // Predicated region
        $region17: #{tpu_custom_call.1} parent=11 // pred_check
          %p161 = pneg %p85
        $region18: #{tpu_custom_call.1} parent=11 // pred_check_branch
          %163 = sbr.rel (%p161) target = $region20
        $region19: #{tpu_custom_call.1} parent=11 // pred_region
          _
        $region20: #{tpu_custom_call.1} parent=11 // pred_fallthru
          _
        // Predicated region
        $region21: #{tpu_custom_call.1} parent=11 // pred_check
          %p164 = pneg %p106
        $region22: #{tpu_custom_call.1} parent=11 // pred_check_branch
          %166 = sbr.rel (%p164) target = $region24
        $region23: #{tpu_custom_call.1} parent=11 // pred_region
          _
        $region24: #{tpu_custom_call.1} parent=11 // pred_fallthru
          _
      $region12: #{tpu_custom_call.1} parent=5 // pred_fallthru
        _
      %p167 = scmp.lt.s32.totalorder %s17, 2
      // Predicated region
      $region25: #{tpu_custom_call.1} parent=5 // pred_check
        %p168 = pneg %p167
      $region26: #{tpu_custom_call.1} parent=5 // pred_check_branch
        %170 = sbr.rel (%p168) target = $region28
      $region27: #{tpu_custom_call.1} parent=5 // pred_region
        // Predicated region
        $region29: #{tpu_custom_call.1} parent=27 // pred_check
          %p171 = pneg %p37
        $region30: #{tpu_custom_call.1} parent=27 // pred_check_branch
          %173 = sbr.rel (%p171) target = $region32
        $region31: #{tpu_custom_call.1} parent=27 // pred_region
          %s174 = sand.u32 %s27, 1
          %s175 = scalar_lea.sflag [#allocation3], %s174
          %s176 = sand.u32 %s27, 1
          %s177 = smul.addr %s176, 8
          %s178 = scalar_lea.vmem [#allocation2], %s177
          %180 = vsyncadd %s175, 0
          %s181 = smul.addr %s17, 8
          %s182 = scalar_lea.hbm %s0, %s181
          %s184 = sshll.u32 %s182, 4
          %s185 = int_to_ptr.hbm [resolvable:$true] %s184
          %s186 = sshll.u32 %s178, 4
          %s187 = int_to_ptr.vmem [resolvable:$true] %s186
          %189 = dma.hbm_to_vmem [thread:$0]  %s185, 128, %s187, %s175
        $region32: #{tpu_custom_call.1} parent=27 // pred_fallthru
          _
      $region28: #{tpu_custom_call.1} parent=5 // pred_fallthru
        _
      %p190 = scmp.le.s32.totalorder 1, %s17
      %p191 = scmp.lt.s32.totalorder %s17, 3
      %p192 = pnand %p190, %p191
      %p193 = pneg %p192
      // Predicated region
      $region33: #{tpu_custom_call.1} parent=5 // pred_check
        _
      $region34: #{tpu_custom_call.1} parent=5 // pred_check_branch
        %195 = sbr.rel (%p192) target = $region36
      $region35: #{tpu_custom_call.1} parent=5 // pred_region
        %s196 = ssub.s32 %s17, 1
        %s197 = sand.u32 %s30, 1
        %s198 = scalar_lea.sflag [#allocation3], %s197
        %s199 = sand.u32 %s30, 1
        %s200 = smul.addr %s199, 8
        %s201 = scalar_lea.vmem [#allocation2], %s200
        // Predicated region
        $region37: #{tpu_custom_call.1} parent=35 // pred_check
          %p202 = pneg %p43
        $region38: #{tpu_custom_call.1} parent=35 // pred_check_branch
          %204 = sbr.rel (%p202) target = $region40
        $region39: #{tpu_custom_call.1} parent=35 // pred_region
          %206 = dma.done %s198, 128
        $region40: #{tpu_custom_call.1} parent=35 // pred_fallthru
          _
        // Predicated region
        $region41: #{tpu_custom_call.1} parent=35 // pred_check
          %p207 = pneg %p64
        $region42: #{tpu_custom_call.1} parent=35 // pred_check_branch
          %209 = sbr.rel (%p207) target = $region44
        $region43: #{tpu_custom_call.1} parent=35 // pred_region
          %211 = dma.done [#allocation6], 9216
        $region44: #{tpu_custom_call.1} parent=35 // pred_fallthru
          _
        %s212 = sand.u32 %s30, 1
        %s213 = scalar_lea.sflag [#allocation3], %s212
        %s214 = sand.u32 %s30, 1
        %s215 = smul.addr %s214, 8
        %s216 = scalar_lea.vmem [#allocation2], %s215
        %p217 = pneg %p43
        %p218 = pneg %p40
        %p219 = pneg %p64
        %p220 = pneg %p61
        %p221 = pneg %p85
        %p222 = pneg %p82
        %p223 = pneg %p106
        %p224 = pneg %p103
        %p225 = pneg %p132
        %p226 = pneg %p129
        %s227 = sand.u32 %s119, 1
        %s228 = scalar_lea.sflag [#allocation4], %s227
        %s229 = sand.u32 %s119, 1
        %s230 = smul.addr %s229, 8
        %s231 = scalar_lea.vmem [#allocation7], %s230
        %v232 = vld [vmem:[%s201] sm:$0xff]
        %v233 = vlaneseq
        %v234 = vand.u32 %v233, 127
        %235 = vset.pattern.permute.xlu0 0
        %236 = vperm.xlu0 %235, %v232
        %v237 = vpop.permute.xlu0 %236
        %vm238 = vcmp.eq.s32.totalorder %v234, %v237
        %v239 = vsel %vm238, 1, 0
        %v240 = vcvt.s32.f32 %v239
        %v241 = vpack.c.bf16 %v240, %v240
        %242 = vset.pattern.permute.xlu0 1
        %243 = vperm.xlu0 %242, %v232
        %v244 = vpop.permute.xlu0 %243
        %vm245 = vcmp.eq.s32.totalorder %v234, %v244
        %v246 = vsel %vm245, 1, 0
        %v247 = vcvt.s32.f32 %v246
        %v248 = vpack.c.bf16 %v247, %v247
        %249 = vset.pattern.permute.xlu0 2
        %250 = vperm.xlu0 %249, %v232
        %v251 = vpop.permute.xlu0 %250
        %vm252 = vcmp.eq.s32.totalorder %v234, %v251
        %v253 = vsel %vm252, 1, 0
        %v254 = vcvt.s32.f32 %v253
        %v255 = vpack.c.bf16 %v254, %v254
        %256 = vset.pattern.permute.xlu0 3
        %257 = vperm.xlu0 %256, %v232
        %v258 = vpop.permute.xlu0 %257
        %vm259 = vcmp.eq.s32.totalorder %v234, %v258
        %v260 = vsel %vm259, 1, 0
        %v261 = vcvt.s32.f32 %v260
        %v262 = vpack.c.bf16 %v261, %v261
        %263 = vset.pattern.permute.xlu0 4
        %264 = vperm.xlu0 %263, %v232
        %v265 = vpop.permute.xlu0 %264
        %vm266 = vcmp.eq.s32.totalorder %v234, %v265
        %v267 = vsel %vm266, 1, 0
        %v268 = vcvt.s32.f32 %v267
        %v269 = vpack.c.bf16 %v268, %v268
        %270 = vset.pattern.permute.xlu0 5
        %271 = vperm.xlu0 %270, %v232
        %v272 = vpop.permute.xlu0 %271
        %vm273 = vcmp.eq.s32.totalorder %v234, %v272
        %v274 = vsel %vm273, 1, 0
        %v275 = vcvt.s32.f32 %v274
        %v276 = vpack.c.bf16 %v275, %v275
        %277 = vset.pattern.permute.xlu0 6
        %278 = vperm.xlu0 %277, %v232
        %v279 = vpop.permute.xlu0 %278
        %vm280 = vcmp.eq.s32.totalorder %v234, %v279
        %v281 = vsel %vm280, 1, 0
        %v282 = vcvt.s32.f32 %v281
        %v283 = vpack.c.bf16 %v282, %v282
        %284 = vset.pattern.permute.xlu0 7
        %285 = vperm.xlu0 %284, %v232
        %v286 = vpop.permute.xlu0 %285
        %vm287 = vcmp.eq.s32.totalorder %v234, %v286
        %v288 = vsel %vm287, 1, 0
        %v289 = vcvt.s32.f32 %v288
        %v290 = vpack.c.bf16 %v289, %v289
        %291 = vset.pattern.permute.xlu0 8
        %292 = vperm.xlu0 %291, %v232
        %v293 = vpop.permute.xlu0 %292
        %vm294 = vcmp.eq.s32.totalorder %v234, %v293
        %v295 = vsel %vm294, 1, 0
        %v296 = vcvt.s32.f32 %v295
        %v297 = vpack.c.bf16 %v296, %v296
        %v298 = vld [vmem:[#allocation5] sm:$0xf]
        %v299 = vld [vmem:[#allocation5 + $0x4] sm:$0xf]
        %v300 = vld [vmem:[#allocation5 + $0x8] sm:$0xf]
        %v301 = vld [vmem:[#allocation5 + $0xc] sm:$0xf]
        %v302 = vld [vmem:[#allocation5 + $0x10] sm:$0xf]
        %v303 = vld [vmem:[#allocation5 + $0x14] sm:$0xf]
        %v304 = vld [vmem:[#allocation5 + $0x18] sm:$0xf]
        %v305 = vld [vmem:[#allocation5 + $0x1c] sm:$0xf]
        %v306 = vld [vmem:[#allocation5 + $0x20] sm:$0xf]
        %v307 = vld [vmem:[#allocation5 + $0x24] sm:$0xf]
        %v308 = vld [vmem:[#allocation5 + $0x28] sm:$0xf]
        %v309 = vld [vmem:[#allocation5 + $0x2c] sm:$0xf]
        %v310 = vld [vmem:[#allocation5 + $0x30] sm:$0xf]
        %v311 = vld [vmem:[#allocation5 + $0x34] sm:$0xf]
        %v312 = vld [vmem:[#allocation5 + $0x38] sm:$0xf]
        %v313 = vld [vmem:[#allocation5 + $0x3c] sm:$0xf]
        %v314 = vld [vmem:[#allocation5 + $0x40] sm:$0xf]
        %v315 = vld [vmem:[#allocation5 + $0x44] sm:$0xf]
        %v316 = vld [vmem:[#allocation5 + $0x48] sm:$0xf]
        %v317 = vld [vmem:[#allocation5 + $0x4c] sm:$0xf]
        %v318 = vld [vmem:[#allocation5 + $0x50] sm:$0xf]
        %v319 = vld [vmem:[#allocation5 + $0x54] sm:$0xf]
        %v320 = vld [vmem:[#allocation5 + $0x58] sm:$0xf]
        %v321 = vld [vmem:[#allocation5 + $0x5c] sm:$0xf]
        %v322 = vld [vmem:[#allocation5 + $0x60] sm:$0xf]
        %v323 = vld [vmem:[#allocation5 + $0x64] sm:$0xf]
        %v324 = vld [vmem:[#allocation5 + $0x68] sm:$0xf]
        %v325 = vld [vmem:[#allocation5 + $0x6c] sm:$0xf]
        %v326 = vld [vmem:[#allocation5 + $0x70] sm:$0xf]
        %v327 = vld [vmem:[#allocation5 + $0x74] sm:$0xf]
        %v328 = vld [vmem:[#allocation5 + $0x78] sm:$0xf]
        %v329 = vld [vmem:[#allocation5 + $0x7c] sm:$0xf]
        %v330 = vld [vmem:[#allocation5 + $0x80] sm:$0xf]
        %v331 = vld [vmem:[#allocation5 + $0x84] sm:$0xf]
        %v332 = vld [vmem:[#allocation5 + $0x88] sm:$0xf]
        %v333 = vld [vmem:[#allocation5 + $0x8c] sm:$0xf]
        %v334 = vld [vmem:[#allocation5 + $0x90] sm:$0xf]
        %v335 = vld [vmem:[#allocation5 + $0x94] sm:$0xf]
        %v336 = vld [vmem:[#allocation5 + $0x98] sm:$0xf]
        %v337 = vld [vmem:[#allocation5 + $0x9c] sm:$0xf]
        %v338 = vld [vmem:[#allocation5 + $0xa0] sm:$0xf]
        %v339 = vld [vmem:[#allocation5 + $0xa4] sm:$0xf]
        %v340 = vld [vmem:[#allocation5 + $0xa8] sm:$0xf]
        %v341 = vld [vmem:[#allocation5 + $0xac] sm:$0xf]
        %v342 = vld [vmem:[#allocation5 + $0xb0] sm:$0xf]
        %v343 = vld [vmem:[#allocation5 + $0xb4] sm:$0xf]
        %v344 = vld [vmem:[#allocation5 + $0xb8] sm:$0xf]
        %v345 = vld [vmem:[#allocation5 + $0xbc] sm:$0xf]
        %v346 = vld [vmem:[#allocation5 + $0xc0] sm:$0xf]
        %v347 = vld [vmem:[#allocation5 + $0xc4] sm:$0xf]
        %v348 = vld [vmem:[#allocation5 + $0xc8] sm:$0xf]
        %v349 = vld [vmem:[#allocation5 + $0xcc] sm:$0xf]
        %v350 = vld [vmem:[#allocation5 + $0xd0] sm:$0xf]
        %v351 = vld [vmem:[#allocation5 + $0xd4] sm:$0xf]
        %v352 = vld [vmem:[#allocation5 + $0xd8] sm:$0xf]
        %v353 = vld [vmem:[#allocation5 + $0xdc] sm:$0xf]
        %v354 = vld [vmem:[#allocation5 + $0xe0] sm:$0xf]
        %v355 = vld [vmem:[#allocation5 + $0xe4] sm:$0xf]
        %v356 = vld [vmem:[#allocation5 + $0xe8] sm:$0xf]
        %v357 = vld [vmem:[#allocation5 + $0xec] sm:$0xf]
        %v358 = vld [vmem:[#allocation5 + $0xf0] sm:$0xf]
        %v359 = vld [vmem:[#allocation5 + $0xf4] sm:$0xf]
        %v360 = vld [vmem:[#allocation5 + $0xf8] sm:$0xf]
        %v361 = vld [vmem:[#allocation5 + $0xfc] sm:$0xf]
        %v362 = vld [vmem:[#allocation5 + $0x100] sm:$0xf]
        %v363 = vld [vmem:[#allocation5 + $0x104] sm:$0xf]
        %v364 = vld [vmem:[#allocation5 + $0x108] sm:$0xf]
        %v365 = vld [vmem:[#allocation5 + $0x10c] sm:$0xf]
        %v366 = vld [vmem:[#allocation5 + $0x110] sm:$0xf]
        %v367 = vld [vmem:[#allocation5 + $0x114] sm:$0xf]
        %v368 = vld [vmem:[#allocation5 + $0x118] sm:$0xf]
        %v369 = vld [vmem:[#allocation5 + $0x11c] sm:$0xf]
        %v370 = vld [vmem:[#allocation5 + $0x120] sm:$0xf]
        %v371 = vld [vmem:[#allocation5 + $0x124] sm:$0xf]
        %v372 = vld [vmem:[#allocation5 + $0x128] sm:$0xf]
        %v373 = vld [vmem:[#allocation5 + $0x12c] sm:$0xf]
        %v374 = vld [vmem:[#allocation5 + $0x130] sm:$0xf]
        %v375 = vld [vmem:[#allocation5 + $0x134] sm:$0xf]
        %v376 = vld [vmem:[#allocation5 + $0x138] sm:$0xf]
        %v377 = vld [vmem:[#allocation5 + $0x13c] sm:$0xf]
        %v378 = vld [vmem:[#allocation5 + $0x140] sm:$0xf]
        %v379 = vld [vmem:[#allocation5 + $0x144] sm:$0xf]
        %v380 = vld [vmem:[#allocation5 + $0x148] sm:$0xf]
        %v381 = vld [vmem:[#allocation5 + $0x14c] sm:$0xf]
        %v382 = vld [vmem:[#allocation5 + $0x150] sm:$0xf]
        %v383 = vld [vmem:[#allocation5 + $0x154] sm:$0xf]
        %v384 = vld [vmem:[#allocation5 + $0x158] sm:$0xf]
        %v385 = vld [vmem:[#allocation5 + $0x15c] sm:$0xf]
        %v386 = vld [vmem:[#allocation5 + $0x160] sm:$0xf]
        %v387 = vld [vmem:[#allocation5 + $0x164] sm:$0xf]
        %v388 = vld [vmem:[#allocation5 + $0x168] sm:$0xf]
        %v389 = vld [vmem:[#allocation5 + $0x16c] sm:$0xf]
        %v390 = vld [vmem:[#allocation5 + $0x170] sm:$0xf]
        %v391 = vld [vmem:[#allocation5 + $0x174] sm:$0xf]
        %v392 = vld [vmem:[#allocation5 + $0x178] sm:$0xf]
        %v393 = vld [vmem:[#allocation5 + $0x17c] sm:$0xf]
        %v394 = vld [vmem:[#allocation5 + $0x180] sm:$0xf]
        %v395 = vld [vmem:[#allocation5 + $0x184] sm:$0xf]
        %v396 = vld [vmem:[#allocation5 + $0x188] sm:$0xf]
        %v397 = vld [vmem:[#allocation5 + $0x18c] sm:$0xf]
        %v398 = vld [vmem:[#allocation5 + $0x190] sm:$0xf]
        %v399 = vld [vmem:[#allocation5 + $0x194] sm:$0xf]
        %v400 = vld [vmem:[#allocation5 + $0x198] sm:$0xf]
        %v401 = vld [vmem:[#allocation5 + $0x19c] sm:$0xf]
        %v402 = vld [vmem:[#allocation5 + $0x1a0] sm:$0xf]
        %v403 = vld [vmem:[#allocation5 + $0x1a4] sm:$0xf]
        %v404 = vld [vmem:[#allocation5 + $0x1a8] sm:$0xf]
        %v405 = vld [vmem:[#allocation5 + $0x1ac] sm:$0xf]
        %v406 = vld [vmem:[#allocation5 + $0x1b0] sm:$0xf]
        %v407 = vld [vmem:[#allocation5 + $0x1b4] sm:$0xf]
        %v408 = vld [vmem:[#allocation5 + $0x1b8] sm:$0xf]
        %v409 = vld [vmem:[#allocation5 + $0x1bc] sm:$0xf]
        %v410 = vld [vmem:[#allocation5 + $0x1c0] sm:$0xf]
        %v411 = vld [vmem:[#allocation5 + $0x1c4] sm:$0xf]
        %v412 = vld [vmem:[#allocation5 + $0x1c8] sm:$0xf]
        %v413 = vld [vmem:[#allocation5 + $0x1cc] sm:$0xf]
        %v414 = vld [vmem:[#allocation5 + $0x1d0] sm:$0xf]
        %v415 = vld [vmem:[#allocation5 + $0x1d4] sm:$0xf]
        %v416 = vld [vmem:[#allocation5 + $0x1d8] sm:$0xf]
        %v417 = vld [vmem:[#allocation5 + $0x1dc] sm:$0xf]
        %v418 = vld [vmem:[#allocation5 + $0x1e0] sm:$0xf]
        %v419 = vld [vmem:[#allocation5 + $0x1e4] sm:$0xf]
        %v420 = vld [vmem:[#allocation5 + $0x1e8] sm:$0xf]
        %v421 = vld [vmem:[#allocation5 + $0x1ec] sm:$0xf]
        %v422 = vld [vmem:[#allocation5 + $0x1f0] sm:$0xf]
        %v423 = vld [vmem:[#allocation5 + $0x1f4] sm:$0xf]
        %v424 = vld [vmem:[#allocation5 + $0x1f8] sm:$0xf]
        %v425 = vld [vmem:[#allocation5 + $0x1fc] sm:$0xf]
        %v426 = vld [vmem:[#allocation5 + $0x200] sm:$0xf]
        %v427 = vld [vmem:[#allocation5 + $0x204] sm:$0xf]
        %v428 = vld [vmem:[#allocation5 + $0x208] sm:$0xf]
        %v429 = vld [vmem:[#allocation5 + $0x20c] sm:$0xf]
        %v430 = vld [vmem:[#allocation5 + $0x210] sm:$0xf]
        %v431 = vld [vmem:[#allocation5 + $0x214] sm:$0xf]
        %v432 = vld [vmem:[#allocation5 + $0x218] sm:$0xf]
        %v433 = vld [vmem:[#allocation5 + $0x21c] sm:$0xf]
        %v434 = vld [vmem:[#allocation5 + $0x220] sm:$0xf]
        %v435 = vld [vmem:[#allocation5 + $0x224] sm:$0xf]
        %v436 = vld [vmem:[#allocation5 + $0x228] sm:$0xf]
        %v437 = vld [vmem:[#allocation5 + $0x22c] sm:$0xf]
        %v438 = vld [vmem:[#allocation5 + $0x230] sm:$0xf]
        %v439 = vld [vmem:[#allocation5 + $0x234] sm:$0xf]
        %v440 = vld [vmem:[#allocation5 + $0x238] sm:$0xf]
        %v441 = vld [vmem:[#allocation5 + $0x23c] sm:$0xf]
        %v586 = vunpack.c.l.b16 %v298
        %v587 = vunpack.c.l.b16 %v299
        %v588 = vunpack.c.l.b16 %v300
        %v589 = vunpack.c.l.b16 %v301
        %v590 = vunpack.c.l.b16 %v302
        %v591 = vunpack.c.l.b16 %v303
        %v592 = vunpack.c.l.b16 %v304
        %v593 = vunpack.c.l.b16 %v305
        %v594 = vunpack.c.l.b16 %v306
        %v595 = vunpack.c.l.b16 %v307
        %v596 = vunpack.c.l.b16 %v308
        %v597 = vunpack.c.l.b16 %v309
        %v598 = vunpack.c.l.b16 %v310
        %v599 = vunpack.c.l.b16 %v311
        %v600 = vunpack.c.l.b16 %v312
        %v601 = vunpack.c.l.b16 %v313
        %v602 = vunpack.c.l.b16 %v314
        %v603 = vunpack.c.l.b16 %v315
        %v604 = vunpack.c.l.b16 %v316
        %v605 = vunpack.c.l.b16 %v317
        %v606 = vunpack.c.l.b16 %v318
        %v607 = vunpack.c.l.b16 %v319
        %v608 = vunpack.c.l.b16 %v320
        %v609 = vunpack.c.l.b16 %v321
        %v610 = vunpack.c.l.b16 %v322
        %v611 = vunpack.c.l.b16 %v323
        %v612 = vunpack.c.l.b16 %v324
        %v613 = vunpack.c.l.b16 %v325
        %v614 = vunpack.c.l.b16 %v326
        %v615 = vunpack.c.l.b16 %v327
        %v616 = vunpack.c.l.b16 %v328
        %v617 = vunpack.c.l.b16 %v329
        %v618 = vunpack.c.l.b16 %v330
        %v619 = vunpack.c.l.b16 %v331
        %v620 = vunpack.c.l.b16 %v332
        %v621 = vunpack.c.l.b16 %v333
        %v622 = vunpack.c.l.b16 %v334
        %v623 = vunpack.c.l.b16 %v335
        %v624 = vunpack.c.l.b16 %v336
        %v625 = vunpack.c.l.b16 %v337
        %v626 = vunpack.c.l.b16 %v338
        %v627 = vunpack.c.l.b16 %v339
        %v628 = vunpack.c.l.b16 %v340
        %v629 = vunpack.c.l.b16 %v341
        %v630 = vunpack.c.l.b16 %v342
        %v631 = vunpack.c.l.b16 %v343
        %v632 = vunpack.c.l.b16 %v344
        %v633 = vunpack.c.l.b16 %v345
        %v634 = vunpack.c.l.b16 %v346
        %v635 = vunpack.c.l.b16 %v347
        %v636 = vunpack.c.l.b16 %v348
        %v637 = vunpack.c.l.b16 %v349
        %v638 = vunpack.c.l.b16 %v350
        %v639 = vunpack.c.l.b16 %v351
        %v640 = vunpack.c.l.b16 %v352
        %v641 = vunpack.c.l.b16 %v353
        %v642 = vunpack.c.l.b16 %v354
        %v643 = vunpack.c.l.b16 %v355
        %v644 = vunpack.c.l.b16 %v356
        %v645 = vunpack.c.l.b16 %v357
        %v646 = vunpack.c.l.b16 %v358
        %v647 = vunpack.c.l.b16 %v359
        %v648 = vunpack.c.l.b16 %v360
        %v649 = vunpack.c.l.b16 %v361
        %v650 = vunpack.c.l.b16 %v362
        %v651 = vunpack.c.l.b16 %v363
        %v652 = vunpack.c.l.b16 %v364
        %v653 = vunpack.c.l.b16 %v365
        %v654 = vunpack.c.l.b16 %v366
        %v655 = vunpack.c.l.b16 %v367
        %v656 = vunpack.c.l.b16 %v368
        %v657 = vunpack.c.l.b16 %v369
        %v658 = vunpack.c.l.b16 %v370
        %v659 = vunpack.c.l.b16 %v371
        %v660 = vunpack.c.l.b16 %v372
        %v661 = vunpack.c.l.b16 %v373
        %v662 = vunpack.c.l.b16 %v374
        %v663 = vunpack.c.l.b16 %v375
        %v664 = vunpack.c.l.b16 %v376
        %v665 = vunpack.c.l.b16 %v377
        %v666 = vunpack.c.l.b16 %v378
        %v667 = vunpack.c.l.b16 %v379
        %v668 = vunpack.c.l.b16 %v380
        %v669 = vunpack.c.l.b16 %v381
        %v670 = vunpack.c.l.b16 %v382
        %v671 = vunpack.c.l.b16 %v383
        %v672 = vunpack.c.l.b16 %v384
        %v673 = vunpack.c.l.b16 %v385
        %v674 = vunpack.c.l.b16 %v386
        %v675 = vunpack.c.l.b16 %v387
        %v676 = vunpack.c.l.b16 %v388
        %v677 = vunpack.c.l.b16 %v389
        %v678 = vunpack.c.l.b16 %v390
        %v679 = vunpack.c.l.b16 %v391
        %v680 = vunpack.c.l.b16 %v392
        %v681 = vunpack.c.l.b16 %v393
        %v682 = vunpack.c.l.b16 %v394
        %v683 = vunpack.c.l.b16 %v395
        %v684 = vunpack.c.l.b16 %v396
        %v685 = vunpack.c.l.b16 %v397
        %v686 = vunpack.c.l.b16 %v398
        %v687 = vunpack.c.l.b16 %v399
        %v688 = vunpack.c.l.b16 %v400
        %v689 = vunpack.c.l.b16 %v401
        %v690 = vunpack.c.l.b16 %v402
        %v691 = vunpack.c.l.b16 %v403
        %v692 = vunpack.c.l.b16 %v404
        %v693 = vunpack.c.l.b16 %v405
        %v694 = vunpack.c.l.b16 %v406
        %v695 = vunpack.c.l.b16 %v407
        %v696 = vunpack.c.l.b16 %v408
        %v697 = vunpack.c.l.b16 %v409
        %v698 = vunpack.c.l.b16 %v410
        %v699 = vunpack.c.l.b16 %v411
        %v700 = vunpack.c.l.b16 %v412
        %v701 = vunpack.c.l.b16 %v413
        %v702 = vunpack.c.l.b16 %v414
        %v703 = vunpack.c.l.b16 %v415
        %v704 = vunpack.c.l.b16 %v416
        %v705 = vunpack.c.l.b16 %v417
        %v706 = vunpack.c.l.b16 %v418
        %v707 = vunpack.c.l.b16 %v419
        %v708 = vunpack.c.l.b16 %v420
        %v709 = vunpack.c.l.b16 %v421
        %v710 = vunpack.c.l.b16 %v422
        %v711 = vunpack.c.l.b16 %v423
        %v712 = vunpack.c.l.b16 %v424
        %v713 = vunpack.c.l.b16 %v425
        %v714 = vunpack.c.l.b16 %v426
        %v715 = vunpack.c.l.b16 %v427
        %v716 = vunpack.c.l.b16 %v428
        %v717 = vunpack.c.l.b16 %v429
        %v718 = vunpack.c.l.b16 %v430
        %v719 = vunpack.c.l.b16 %v431
        %v720 = vunpack.c.l.b16 %v432
        %v721 = vunpack.c.l.b16 %v433
        %v722 = vunpack.c.l.b16 %v434
        %v723 = vunpack.c.l.b16 %v435
        %v724 = vunpack.c.l.b16 %v436
        %v725 = vunpack.c.l.b16 %v437
        %v726 = vunpack.c.l.b16 %v438
        %v727 = vunpack.c.l.b16 %v439
        %v728 = vunpack.c.l.b16 %v440
        %v729 = vunpack.c.l.b16 %v441
        %v730 = vpack.c.b16 %v587, %v586
        %v731 = vpack.c.b16 %v589, %v588
        %v732 = vpack.c.b16 %v591, %v590
        %v733 = vpack.c.b16 %v593, %v592
        %v734 = vpack.c.b16 %v595, %v594
        %v735 = vpack.c.b16 %v597, %v596
        %v736 = vpack.c.b16 %v599, %v598
        %v737 = vpack.c.b16 %v601, %v600
        %v738 = vpack.c.b16 %v603, %v602
        %v739 = vpack.c.b16 %v605, %v604
        %v740 = vpack.c.b16 %v607, %v606
        %v741 = vpack.c.b16 %v609, %v608
        %v742 = vpack.c.b16 %v611, %v610
        %v743 = vpack.c.b16 %v613, %v612
        %v744 = vpack.c.b16 %v615, %v614
        %v745 = vpack.c.b16 %v617, %v616
        %v746 = vpack.c.b16 %v619, %v618
        %v747 = vpack.c.b16 %v621, %v620
        %v748 = vpack.c.b16 %v623, %v622
        %v749 = vpack.c.b16 %v625, %v624
        %v750 = vpack.c.b16 %v627, %v626
        %v751 = vpack.c.b16 %v629, %v628
        %v752 = vpack.c.b16 %v631, %v630
        %v753 = vpack.c.b16 %v633, %v632
        %v754 = vpack.c.b16 %v635, %v634
        %v755 = vpack.c.b16 %v637, %v636
        %v756 = vpack.c.b16 %v639, %v638
        %v757 = vpack.c.b16 %v641, %v640
        %v758 = vpack.c.b16 %v643, %v642
        %v759 = vpack.c.b16 %v645, %v644
        %v760 = vpack.c.b16 %v647, %v646
        %v761 = vpack.c.b16 %v649, %v648
        %v762 = vpack.c.b16 %v651, %v650
        %v763 = vpack.c.b16 %v653, %v652
        %v764 = vpack.c.b16 %v655, %v654
        %v765 = vpack.c.b16 %v657, %v656
        %v766 = vpack.c.b16 %v659, %v658
        %v767 = vpack.c.b16 %v661, %v660
        %v768 = vpack.c.b16 %v663, %v662
        %v769 = vpack.c.b16 %v665, %v664
        %v770 = vpack.c.b16 %v667, %v666
        %v771 = vpack.c.b16 %v669, %v668
        %v772 = vpack.c.b16 %v671, %v670
        %v773 = vpack.c.b16 %v673, %v672
        %v774 = vpack.c.b16 %v675, %v674
        %v775 = vpack.c.b16 %v677, %v676
        %v776 = vpack.c.b16 %v679, %v678
        %v777 = vpack.c.b16 %v681, %v680
        %v778 = vpack.c.b16 %v683, %v682
        %v779 = vpack.c.b16 %v685, %v684
        %v780 = vpack.c.b16 %v687, %v686
        %v781 = vpack.c.b16 %v689, %v688
        %v782 = vpack.c.b16 %v691, %v690
        %v783 = vpack.c.b16 %v693, %v692
        %v784 = vpack.c.b16 %v695, %v694
        %v785 = vpack.c.b16 %v697, %v696
        %v786 = vpack.c.b16 %v699, %v698
        %v787 = vpack.c.b16 %v701, %v700
        %v788 = vpack.c.b16 %v703, %v702
        %v789 = vpack.c.b16 %v705, %v704
        %v790 = vpack.c.b16 %v707, %v706
        %v791 = vpack.c.b16 %v709, %v708
        %v792 = vpack.c.b16 %v711, %v710
        %v793 = vpack.c.b16 %v713, %v712
        %v794 = vpack.c.b16 %v715, %v714
        %v795 = vpack.c.b16 %v717, %v716
        %v796 = vpack.c.b16 %v719, %v718
        %v797 = vpack.c.b16 %v721, %v720
        %v798 = vpack.c.b16 %v723, %v722
        %v799 = vpack.c.b16 %v725, %v724
        %v800 = vpack.c.b16 %v727, %v726
        %v801 = vpack.c.b16 %v729, %v728
        %874 = vmatpush.bf16.msra.mxu0 %v737
        %875 = vmatpush.bf16.msra.mxu0 %v736
        %876 = vmatpush.bf16.msra.mxu0 %v735
        %877 = vmatpush.bf16.msra.mxu0 %v734
        %878 = vmatpush.bf16.msra.mxu0 %v733
        %879 = vmatpush.bf16.msra.mxu0 %v732
        %880 = vmatpush.bf16.msra.mxu0 %v731
        %881 = vmatpush.bf16.msra.mxu0 %v730
        %882 = vmatmul.bf16.gmra.mxu0 %v241
        %v883 = vpop.f32.mrf.mxu0
        %v884 = vadd.f32 0.0, %v883
        %v885 = vpop.f32.mrf.mxu0
        %886 = vdwg.mxu0
        %887 = vmatpush.bf16.msra.mxu0 %v745
        %888 = vmatpush.bf16.msra.mxu0 %v744
        %889 = vmatpush.bf16.msra.mxu0 %v743
        %890 = vmatpush.bf16.msra.mxu0 %v742
        %891 = vmatpush.bf16.msra.mxu0 %v741
        %892 = vmatpush.bf16.msra.mxu0 %v740
        %893 = vmatpush.bf16.msra.mxu0 %v739
        %894 = vmatpush.bf16.msra.mxu0 %v738
        %895 = vmatmul.bf16.gmra.mxu0 %v248
        %v896 = vpop.f32.mrf.mxu0
        %v897 = vadd.f32 %v884, %v896
        %v898 = vpop.f32.mrf.mxu0
        %899 = vdwg.mxu0
        %900 = vmatpush.bf16.msra.mxu0 %v753
        %901 = vmatpush.bf16.msra.mxu0 %v752
        %902 = vmatpush.bf16.msra.mxu0 %v751
        %903 = vmatpush.bf16.msra.mxu0 %v750
        %904 = vmatpush.bf16.msra.mxu0 %v749
        %905 = vmatpush.bf16.msra.mxu0 %v748
        %906 = vmatpush.bf16.msra.mxu0 %v747
        %907 = vmatpush.bf16.msra.mxu0 %v746
        %908 = vmatmul.bf16.gmra.mxu0 %v255
        %v909 = vpop.f32.mrf.mxu0
        %v910 = vadd.f32 %v897, %v909
        %v911 = vpop.f32.mrf.mxu0
        %912 = vdwg.mxu0
        %913 = vmatpush.bf16.msra.mxu0 %v761
        %914 = vmatpush.bf16.msra.mxu0 %v760
        %915 = vmatpush.bf16.msra.mxu0 %v759
        %916 = vmatpush.bf16.msra.mxu0 %v758
        %917 = vmatpush.bf16.msra.mxu0 %v757
        %918 = vmatpush.bf16.msra.mxu0 %v756
        %919 = vmatpush.bf16.msra.mxu0 %v755
        %920 = vmatpush.bf16.msra.mxu0 %v754
        %921 = vmatmul.bf16.gmra.mxu0 %v262
        %v922 = vpop.f32.mrf.mxu0
        %v923 = vadd.f32 %v910, %v922
        %v924 = vpop.f32.mrf.mxu0
        %925 = vdwg.mxu0
        %926 = vmatpush.bf16.msra.mxu0 %v769
        %927 = vmatpush.bf16.msra.mxu0 %v768
        %928 = vmatpush.bf16.msra.mxu0 %v767
        %929 = vmatpush.bf16.msra.mxu0 %v766
        %930 = vmatpush.bf16.msra.mxu0 %v765
        %931 = vmatpush.bf16.msra.mxu0 %v764
        %932 = vmatpush.bf16.msra.mxu0 %v763
        %933 = vmatpush.bf16.msra.mxu0 %v762
        %934 = vmatmul.bf16.gmra.mxu0 %v269
        %v935 = vpop.f32.mrf.mxu0
        %v936 = vadd.f32 %v923, %v935
        %v937 = vpop.f32.mrf.mxu0
        %938 = vdwg.mxu0
        %939 = vmatpush.bf16.msra.mxu0 %v777
        %940 = vmatpush.bf16.msra.mxu0 %v776
        %941 = vmatpush.bf16.msra.mxu0 %v775
        %942 = vmatpush.bf16.msra.mxu0 %v774
        %943 = vmatpush.bf16.msra.mxu0 %v773
        %944 = vmatpush.bf16.msra.mxu0 %v772
        %945 = vmatpush.bf16.msra.mxu0 %v771
        %946 = vmatpush.bf16.msra.mxu0 %v770
        %947 = vmatmul.bf16.gmra.mxu0 %v276
        %v948 = vpop.f32.mrf.mxu0
        %v949 = vadd.f32 %v936, %v948
        %v950 = vpop.f32.mrf.mxu0
        %951 = vdwg.mxu0
        %952 = vmatpush.bf16.msra.mxu0 %v785
        %953 = vmatpush.bf16.msra.mxu0 %v784
        %954 = vmatpush.bf16.msra.mxu0 %v783
        %955 = vmatpush.bf16.msra.mxu0 %v782
        %956 = vmatpush.bf16.msra.mxu0 %v781
        %957 = vmatpush.bf16.msra.mxu0 %v780
        %958 = vmatpush.bf16.msra.mxu0 %v779
        %959 = vmatpush.bf16.msra.mxu0 %v778
        %960 = vmatmul.bf16.gmra.mxu0 %v283
        %v961 = vpop.f32.mrf.mxu0
        %v962 = vadd.f32 %v949, %v961
        %v963 = vpop.f32.mrf.mxu0
        %964 = vdwg.mxu0
        %965 = vmatpush.bf16.msra.mxu0 %v793
        %966 = vmatpush.bf16.msra.mxu0 %v792
        %967 = vmatpush.bf16.msra.mxu0 %v791
        %968 = vmatpush.bf16.msra.mxu0 %v790
        %969 = vmatpush.bf16.msra.mxu0 %v789
        %970 = vmatpush.bf16.msra.mxu0 %v788
        %971 = vmatpush.bf16.msra.mxu0 %v787
        %972 = vmatpush.bf16.msra.mxu0 %v786
        %973 = vmatmul.bf16.gmra.mxu0 %v290
        %v974 = vpop.f32.mrf.mxu0
        %v975 = vadd.f32 %v962, %v974
        %v976 = vpop.f32.mrf.mxu0
        %977 = vdwg.mxu0
        %978 = vmatpush.bf16.msra.mxu0 %v801
        %979 = vmatpush.bf16.msra.mxu0 %v800
        %980 = vmatpush.bf16.msra.mxu0 %v799
        %981 = vmatpush.bf16.msra.mxu0 %v798
        %982 = vmatpush.bf16.msra.mxu0 %v797
        %983 = vmatpush.bf16.msra.mxu0 %v796
        %984 = vmatpush.bf16.msra.mxu0 %v795
        %985 = vmatpush.bf16.msra.mxu0 %v794
        %986 = vmatmul.bf16.gmra.mxu0 %v297
        %v987 = vpop.f32.mrf.mxu0
        %v988 = vadd.f32 %v975, %v987
        %v989 = vpop.f32.mrf.mxu0
        %990 = vdwg.mxu0
        %991 = vadd.xlane.f32.xlu0 %v988
        %v992 = vpop.xlane.xlu0 %991
        %v993 = vmul.f32 %v992, 0.03125
        %v994 = vsub.f32 %v988, %v993
        %v995 = vmul.f32 %v994, %v994
        %996 = vadd.xlane.f32.xlu0 %v995
        %v997 = vpop.xlane.xlu0 %996
        %v998 = vmul.f32 %v993, 96.0
        %v999 = vmul.f32 %v998, %v993
        %v1000 = vsub.f32 %v997, %v999
        %v1001 = vmul.f32 %v1000, 0.03125
        %v1002 = vadd.f32 %v1001, 1e-12
        %v1003 = vrsqrt.pop %v1002
        %v1004 = vmul.f32 %v1003, %v1002
        %v1005 = vmul.f32 %v1004, %v1003
        %v1006 = vmul.f32 0.5, %v1005
        %v1007 = vsub.f32 1.5, %v1006
        %v1008 = vmul.f32 %v1003, %v1007
        %vm1009 = vweird.f32 %v1002
        %vm1010 = vweird.f32 %v1003
        %vm1011 = vmor %vm1009, %vm1010
        %v1012 = vsel %vm1011, %v1003, %v1008
        %v1013 = vmul.f32 %v994, %v1012
        %v1014 = vld [vmem:[%s2] sm:$0x1]
        %v1016 = vperm.slane %v1014, 0
        %v1018 = vmul.f32 %v1013, %v1016
        %v1019 = vld [vmem:[%s3] sm:$0x1]
        %v1021 = vperm.slane %v1019, 0
        %v1023 = vadd.f32 %v1018, %v1021
        %1024 = vst [vmem:[%s231] sm:$0xff] %v1023
        %s1025 = sand.u32 %s119, 1
        %s1026 = scalar_lea.sflag [#allocation4], %s1025
        %s1027 = sand.u32 %s119, 1
        %s1028 = smul.addr %s1027, 8
        %s1029 = scalar_lea.vmem [#allocation7], %s1028
        // Predicated region
        $region45: #{tpu_custom_call.1} parent=35 // pred_check
          %p1030 = pneg %p129
        $region46: #{tpu_custom_call.1} parent=35 // pred_check_branch
          %1032 = sbr.rel (%p1030) target = $region48
        $region47: #{tpu_custom_call.1} parent=35 // pred_region
          %1034 = vsyncadd %s1026, 0
          %s1035 = smul.addr %s22, 8
          %s1036 = scalar_lea.hbm %s4, %s1035
          %s1038 = sshll.u32 %s1029, 4
          %s1039 = int_to_ptr.vmem [resolvable:$true] %s1038
          %s1040 = sshll.u32 %s1036, 4
          %s1041 = int_to_ptr.hbm [resolvable:$true] %s1040
          %1043 = dma.vmem_to_hbm [thread:$0]  %s1039, 128, %s1041, %s1026
        $region48: #{tpu_custom_call.1} parent=35 // pred_fallthru
          _
      $region36: #{tpu_custom_call.1} parent=5 // pred_fallthru
        _
      %p1044 = scmp.le.s32.totalorder 2, %s17
      // Predicated region
      $region49: #{tpu_custom_call.1} parent=5 // pred_check
        %p1045 = pneg %p1044
      $region50: #{tpu_custom_call.1} parent=5 // pred_check_branch
        %1047 = sbr.rel (%p1045) target = $region52
      $region51: #{tpu_custom_call.1} parent=5 // pred_region
        %s1048 = ssub.s32 %s17, 2
        // Predicated region
        $region53: #{tpu_custom_call.1} parent=51 // pred_check
          %p1049 = pneg %p135
        $region54: #{tpu_custom_call.1} parent=51 // pred_check_branch
          %1051 = sbr.rel (%p1049) target = $region56
        $region55: #{tpu_custom_call.1} parent=51 // pred_region
          %s1052 = sand.u32 %s120, 1
          %s1053 = scalar_lea.sflag [#allocation4], %s1052
          %s1054 = sand.u32 %s120, 1
          %s1055 = smul.addr %s1054, 8
          %s1056 = scalar_lea.vmem [#allocation7], %s1055
          %1058 = dma.done %s1053, 128
        $region56: #{tpu_custom_call.1} parent=51 // pred_fallthru
          _
      $region52: #{tpu_custom_call.1} parent=5 // pred_fallthru
        _
    $region6: #{tpu_custom_call.1} parent=1 // loop_footer
      %s21 = sadd.s32 1, %s17
    $region7: #{tpu_custom_call.1} parent=1 // loop_footer_branch
      %16 = sbr.rel target = $region3
    $region8: #{tpu_custom_call.1} parent=1 // loop_exit
      _
    %1059 = vsyncpa [#allocation3], 1
    %s1060 = scalar_lea.sflag [#allocation3], 1
    %1061 = vsyncpa %s1060, 1
    %1062 = vsyncpa [#allocation6], 1
    %1063 = vsyncpa [#allocation4], 1
    %s1064 = scalar_lea.sflag [#allocation4], 1
    %1065 = vsyncpa %s1064, 1

</llo_original>
